<compile_context>
chip_gen: v6e
topology: v6e:2x2x1
jax: 0.10.0
libtpu: 0.0.40
codegen_flags: <defaults>
</compile_context>

<pallas_src>
import numpy as np
import jax
import jax.numpy as jnp
from jax import lax
from jax.experimental import pallas as pl
from jax.experimental.pallas import tpu as pltpu

# Small, self-consistent shapes (module defaults scaled down).
EMB = 16              # embedding_dim == input_size
H = 32                # hidden_size
L = 2                 # num_layer
D = 2                 # num_directions (bidirectional=True)
NUM_CLASS = 27        # output_size
NUM_EMB = NUM_CLASS + 1
B = 2
T = 8

BP = 8                # batch padded to a full sublane group
DH = D * H            # per-layer hidden width (both directions on lanes) = 64
XW = D * H            # padded per-layer input width (EMB <= XW)           = 64
GW = 4 * DH           # gate width: (i,f,o,g) x D                          = 256
SIGW = 3 * DH         # sigmoid gates (i,f,o) span the first 192 lanes
OUT_PAD = 128         # lane-dense padded FC output width

GATE_POS = (0, 1, 3, 2)   # PyTorch gate order (i,f,g,o) -> packed block (i,f,o,g)

assert EMB <= XW and B <= BP


def decoder_kernel(x_ref, h0_ref, c0_ref, wx_ref, wh_ref, b_ref,
                   fcw_ref, fcb_ref, out_ref, xproj_ref, hseq_ref):
    # x_ref    : (T*BP, XW) f32   pre-gathered embeddings, t-major / batch-minor
    # h0/c0    : (L, BP, DH) f32
    # wx_ref   : (L, XW, GW) bf16 (input->gates),  wh_ref: (L, DH, GW) bf16 (h->gates)
    # b_ref    : (L, 1, GW) f32,  fcw_ref: (DH, OUT_PAD) bf16,  fcb_ref: (1, OUT_PAD) f32
    # out_ref  : (T*BP, OUT_PAD) f32
    # xproj_ref: (T*BP, GW) f32 scratch, hseq_ref: (T*BP, DH) f32 scratch
    for l in range(L):
        # Batched input projection for ALL steps (off the serial chain), bias folded in.
        src = x_ref[...] if l == 0 else hseq_ref[...]
        xproj_ref[...] = (
            jnp.dot(src.astype(jnp.bfloat16), wx_ref[l],
                    preferred_element_type=jnp.float32)
            + b_ref[l])

        wh_l = wh_ref[l]                 # hoisted: one load per layer
        h_init = h0_ref[l]
        c_init = c0_ref[l]

        def step(t, carry):
            h, c = carry
            base = pl.multiple_of(t * BP, BP)
            gates = (xproj_ref[pl.ds(base, BP), :]
                     + jnp.dot(h.astype(jnp.bfloat16), wh_l,
                               preferred_element_type=jnp.float32))   # (BP, GW)
            sig = jax.nn.sigmoid(gates[:, :SIGW])      # i | f | o  (3*DH lanes)
            g_g = jnp.tanh(gates[:, SIGW:])            # g          (DH lanes)
            i_g = sig[:, 0 * DH:1 * DH]
            f_g = sig[:, 1 * DH:2 * DH]
            o_g = sig[:, 2 * DH:3 * DH]
            c_new = f_g * c + i_g * g_g                # (BP, DH), both dirs at once
            h_new = o_g * jnp.tanh(c_new)
            hseq_ref[pl.ds(base, BP), :] = h_new
            return (h_new, c_new)

        lax.fori_loop(0, T, step, (h_init, c_init), unroll=True)

    # One batched FC over every (t, b) row + one dense lane-aligned store.
    out_ref[...] = (jnp.dot(hseq_ref[...].astype(jnp.bfloat16), fcw_ref[...],
                            preferred_element_type=jnp.float32)
                    + fcb_ref[...])


def decoder_train_forward(target_inputs, target_lengths, hiddens, packed_params):
    emb_pad, wx, wh, bb, fcw, fcb = packed_params
    h0_pt, c0_pt = hiddens                                   # PyTorch (L*D, B, H) layout
    bsz, tlen = target_inputs.shape
    assert tlen == T and bsz <= BP

    # Encoder state -> (L, BP, D*H): directions side by side on lanes, batch padded.
    def to_state(x):
        s = (jnp.asarray(x, jnp.float32)
             .reshape(L, D, bsz, H)
             .transpose(0, 2, 1, 3)
             .reshape(L, bsz, DH))
        return jnp.pad(s, ((0, 0), (0, BP - bsz), (0, 0)))

    h0s = to_state(h0_pt)
    c0s = to_state(c0_pt)

    # Pre-gathered, zero-padded embeddings, flattened t-major / batch-minor.
    tokens = target_inputs.astype(jnp.int32)
    x_all = jnp.transpose(emb_pad[tokens], (1, 0, 2))            # (T, bsz, XW)
    x_all = jnp.pad(x_all, ((0, 0), (0, BP - bsz), (0, 0)))      # (T, BP, XW)
    x_all = x_all.reshape(T * BP, XW)

    out = pl.pallas_call(
        decoder_kernel,
        out_shape=jax.ShapeDtypeStruct((T * BP, OUT_PAD), jnp.float32),
        grid=(1,),   # single block; shard over a leading parallel axis at real batch sizes
        in_specs=[
            pl.BlockSpec((T * BP, XW), lambda i: (0, 0)),
            pl.BlockSpec((L, BP, DH), lambda i: (0, 0, 0)),
            pl.BlockSpec((L, BP, DH), lambda i: (0, 0, 0)),
            pl.BlockSpec((L, XW, GW), lambda i: (0, 0, 0)),
            pl.BlockSpec((L, DH, GW), lambda i: (0, 0, 0)),
            pl.BlockSpec((L, 1, GW), lambda i: (0, 0, 0)),
            pl.BlockSpec((DH, OUT_PAD), lambda i: (0, 0)),
            pl.BlockSpec((1, OUT_PAD), lambda i: (0, 0)),
        ],
        out_specs=pl.BlockSpec((T * BP, OUT_PAD), lambda i: (0, 0)),
        scratch_shapes=[pltpu.VMEM((T * BP, GW), jnp.float32),
                        pltpu.VMEM((T * BP, DH), jnp.float32)],
        compiler_params=pltpu.CompilerParams(
            dimension_semantics=("arbitrary",)),
    )(x_all, h0s, c0s, wx, wh, bb, fcw, fcb)

    # (T*BP, 128) -> (B, T, NUM_CLASS); zero the rows past each sequence length.
    out = out.reshape(T, BP, OUT_PAD).transpose(1, 0, 2)[:bsz, :, :NUM_CLASS]
    mask = (jnp.arange(tlen, dtype=jnp.int32)[None, :]
            < target_lengths.astype(jnp.int32)[:, None])
    out = jnp.where(mask[:, :, None], out, 0.0)
    return out, target_lengths


def pack_params(emb, w_ih, w_hh, b_sum, fc_w, fc_b):
    """Pack PyTorch-layout LSTM/Linear weights into split (input / hidden) blocks
    with gate columns ordered [i | f | o | g], direction-minor within each gate."""
    wx = np.zeros((L, XW, GW), np.float32)
    wh = np.zeros((L, DH, GW), np.float32)
    bb = np.zeros((L, 1, GW), np.float32)
    for l in range(L):
        for d in range(D):
            wi_t = w_ih[(l, d)].T                            # (in_l, 4H), gates i,f,g,o
            wh_t = w_hh[(l, d)].T                            # (H, 4H)
            in_l = wi_t.shape[0]
            for pg in range(4):                              # PyTorch gate order i,f,g,o
                gp = GATE_POS[pg]
                cs = slice(gp * DH + d * H, gp * DH + (d + 1) * H)
                wx[l, :in_l, cs] = wi_t[:, pg * H:(pg + 1) * H]
                wh[l, d * H:(d + 1) * H, cs] = wh_t[:, pg * H:(pg + 1) * H]
                bb[l, 0, cs] = b_sum[(l, d)][pg * H:(pg + 1) * H]
    emb_pad = np.zeros((NUM_EMB, XW), np.float32)
    emb_pad[:, :EMB] = emb
    fcw_pad = np.zeros((DH, OUT_PAD), np.float32)
    fcw_pad[:, :NUM_CLASS] = fc_w.T
    fcb_pad = np.zeros((1, OUT_PAD), np.float32)
    fcb_pad[0, :NUM_CLASS] = fc_b
    return (jnp.asarray(emb_pad),
            jnp.asarray(wx, jnp.bfloat16),
            jnp.asarray(wh, jnp.bfloat16),
            jnp.asarray(bb),
            jnp.asarray(fcw_pad, jnp.bfloat16),
            jnp.asarray(fcb_pad))


# ------------------------- pure numpy reference -----------------------------
def _sigmoid(x):
    return 1.0 / (1.0 + np.exp(-x))


def reference(tokens, lengths, h0_pt, c0_pt, emb, w_ih, w_hh, b_sum, fc_w, fc_b):
    out = np.zeros((B, T, NUM_CLASS), np.float64)
    for b in range(B):
        h = np.asarray(h0_pt[:, b, :], np.float64).copy()    # (L*D, H)
        c = np.asarray(c0_pt[:, b, :], np.float64).copy()
        for t in range(int(lengths[b])):
            layer_in = np.asarray(emb[int(tokens[b, t])], np.float64)
            for l in range(L):
                dir_h = []
                for d in range(D):
                    ld = l * D + d
                    gates = (np.asarray(w_ih[(l, d)], np.float64) @ layer_in
                             + np.asarray(w_hh[(l, d)], np.float64) @ h[ld]
                             + np.asarray(b_sum[(l, d)], np.float64))
                    i_g = _sigmoid(gates[0:H])
                    f_g = _sigmoid(gates[H:2 * H])
                    g_g = np.tanh(gates[2 * H:3 * H])
                    o_g = _sigmoid(gates[3 * H:4 * H])
                    c[ld] = f_g * c[ld] + i_g * g_g
                    h[ld] = o_g * np.tanh(c[ld])
                    dir_h.append(h[ld].copy())
                layer_in = np.concatenate(dir_h)
            out[b, t] = np.asarray(fc_w, np.float64) @ layer_in + np.asarray(fc_b, np.float64)
    return out


if __name__ == "__main__":
    key = jax.random.PRNGKey(0)
    kit = iter(jax.random.split(key, 32))
    scale = 1.0 / np.sqrt(H)

    # PyTorch-layout parameters (nn.Embedding / nn.LSTM / nn.Linear shapes).
    w_ih, w_hh, b_sum = {}, {}, {}
    for l in range(L):
        in_l = EMB if l == 0 else D * H
        for d in range(D):
            w_ih[(l, d)] = np.asarray(jax.random.uniform(
                next(kit), (4 * H, in_l), minval=-scale, maxval=scale), np.float32)
            w_hh[(l, d)] = np.asarray(jax.random.uniform(
                next(kit), (4 * H, H), minval=-scale, maxval=scale), np.float32)
            b_ih = np.asarray(jax.random.uniform(
                next(kit), (4 * H,), minval=-scale, maxval=scale), np.float32)
            b_hh = np.asarray(jax.random.uniform(
                next(kit), (4 * H,), minval=-scale, maxval=scale), np.float32)
            b_sum[(l, d)] = b_ih + b_hh

    emb = np.asarray(jax.random.normal(next(kit), (NUM_EMB, EMB)), np.float32)
    fscale = 1.0 / np.sqrt(D * H)
    fc_w = np.asarray(jax.random.uniform(
        next(kit), (NUM_CLASS, D * H), minval=-fscale, maxval=fscale), np.float32)
    fc_b = np.asarray(jax.random.uniform(
        next(kit), (NUM_CLASS,), minval=-fscale, maxval=fscale), np.float32)

    packed = pack_params(emb, w_ih, w_hh, b_sum, fc_w, fc_b)

    # Deterministic example inputs.
    target_inputs = jax.random.randint(next(kit), (B, T), 0, NUM_EMB, dtype=jnp.int32)
    target_lengths = jnp.array([T, 5], dtype=jnp.int32)
    h0_pt = jax.random.normal(next(kit), (L * D, B, H), dtype=jnp.float32)
    c0_pt = jax.random.normal(next(kit), (L * D, B, H), dtype=jnp.float32)

    out, lens = decoder_train_forward(target_inputs, target_lengths,
                                      (h0_pt, c0_pt), packed)
    out = jax.block_until_ready(out)

    ref = reference(np.asarray(target_inputs), np.asarray(target_lengths),
                    np.asarray(h0_pt), np.asarray(c0_pt),
                    emb, w_ih, w_hh, b_sum, fc_w, fc_b)
    np.testing.assert_allclose(np.asarray(out), ref, rtol=2e-2, atol=2e-2)
    print("KERNEL_OK")
</pallas_src>

<mosaic_0001>
module attributes {stable_mosaic.version = 11 : i64} {
  func.func @decoder_kernel(%arg0: i32, %arg1: memref<64x64xf32, #tpu.memory_space<vmem>>, %arg2: memref<2x8x64xf32, #tpu.memory_space<vmem>>, %arg3: memref<2x8x64xf32, #tpu.memory_space<vmem>>, %arg4: memref<2x64x256xbf16, #tpu.memory_space<vmem>>, %arg5: memref<2x64x256xbf16, #tpu.memory_space<vmem>>, %arg6: memref<2x1x256xf32, #tpu.memory_space<vmem>>, %arg7: memref<64x128xbf16, #tpu.memory_space<vmem>>, %arg8: memref<1x128xf32, #tpu.memory_space<vmem>>, %arg9: memref<64x128xf32, #tpu.memory_space<vmem>>, %arg10: memref<64x256xf32, #tpu.memory_space<vmem>>, %arg11: memref<64x64xf32, #tpu.memory_space<vmem>>) attributes {dimension_semantics = [#tpu.dimension_semantics<arbitrary>], iteration_bounds = array<i64: 1>, scalar_prefetch = 0 : i64, scratch_operands = 2 : i64, tpu.core_type = #tpu.core_type<tc>, window_params = [{pipeline_mode = #tpu.pipeline_mode<synchronous>, transform_indices = @transform_0, window_bounds = array<i64: 64, 64>}, {pipeline_mode = #tpu.pipeline_mode<synchronous>, transform_indices = @transform_1, window_bounds = array<i64: 2, 8, 64>}, {pipeline_mode = #tpu.pipeline_mode<synchronous>, transform_indices = @transform_2, window_bounds = array<i64: 2, 8, 64>}, {pipeline_mode = #tpu.pipeline_mode<synchronous>, transform_indices = @transform_3, window_bounds = array<i64: 2, 64, 256>}, {pipeline_mode = #tpu.pipeline_mode<synchronous>, transform_indices = @transform_4, window_bounds = array<i64: 2, 64, 256>}, {pipeline_mode = #tpu.pipeline_mode<synchronous>, transform_indices = @transform_5, window_bounds = array<i64: 2, 1, 256>}, {pipeline_mode = #tpu.pipeline_mode<synchronous>, transform_indices = @transform_6, window_bounds = array<i64: 64, 128>}, {pipeline_mode = #tpu.pipeline_mode<synchronous>, transform_indices = @transform_7, window_bounds = array<i64: 1, 128>}, {pipeline_mode = #tpu.pipeline_mode<synchronous>, transform_indices = @transform_8, window_bounds = array<i64: 64, 128>}]} {
    %c0 = arith.constant 0 : index
    %c0_0 = arith.constant 0 : index
    %0 = vector.load %arg1[%c0, %c0_0] : memref<64x64xf32, #tpu.memory_space<vmem>>, vector<64x64xf32>
    %1 = arith.truncf %0 : vector<64x64xf32> to vector<64x64xbf16>
    %c0_1 = arith.constant 0 : index
    %c0_2 = arith.constant 0 : index
    %c0_3 = arith.constant 0 : index
    %2 = vector.load %arg4[%c0_1, %c0_2, %c0_3] : memref<2x64x256xbf16, #tpu.memory_space<vmem>>, vector<1x64x256xbf16>
    %3 = vector.shape_cast %2 : vector<1x64x256xbf16> to vector<64x256xbf16>
    %cst = arith.constant dense<0.000000e+00> : vector<64x256xf32>
    %4 = tpu.matmul %1, %3, %cst {dimension_numbers = #tpu.dot_dimension_numbers<[1], [0], [0], [1], [0, 0, 1, 1], [], []>} : vector<64x64xbf16>, vector<64x256xbf16>, vector<64x256xf32> -> vector<64x256xf32>
    %c0_4 = arith.constant 0 : index
    %c0_5 = arith.constant 0 : index
    %c0_6 = arith.constant 0 : index
    %5 = vector.load %arg6[%c0_4, %c0_5, %c0_6] : memref<2x1x256xf32, #tpu.memory_space<vmem>>, vector<1x1x256xf32>
    %6 = vector.shape_cast %5 : vector<1x1x256xf32> to vector<1x256xf32>
    %7 = vector.broadcast %6 : vector<1x256xf32> to vector<64x256xf32>
    %8 = arith.addf %4, %7 : vector<64x256xf32>
    %c0_7 = arith.constant 0 : index
    %c0_8 = arith.constant 0 : index
    %9 = vector.load %arg10[%c0_7, %c0_8] : memref<64x256xf32, #tpu.memory_space<vmem>>, vector<64x256xf32>
    tpu.vector_store %arg10[%c0_7, %c0_8], %8 {strides = array<i32>} : memref<64x256xf32, #tpu.memory_space<vmem>>, vector<64x256xf32>,
    %c0_9 = arith.constant 0 : index
    %c0_10 = arith.constant 0 : index
    %c0_11 = arith.constant 0 : index
    %10 = vector.load %arg5[%c0_9, %c0_10, %c0_11] : memref<2x64x256xbf16, #tpu.memory_space<vmem>>, vector<1x64x256xbf16>
    %11 = vector.shape_cast %10 : vector<1x64x256xbf16> to vector<64x256xbf16>
    %c0_12 = arith.constant 0 : index
    %c0_13 = arith.constant 0 : index
    %c0_14 = arith.constant 0 : index
    %12 = vector.load %arg2[%c0_12, %c0_13, %c0_14] : memref<2x8x64xf32, #tpu.memory_space<vmem>>, vector<1x8x64xf32>
    %13 = vector.shape_cast %12 : vector<1x8x64xf32> to vector<8x64xf32>
    %c0_15 = arith.constant 0 : index
    %c0_16 = arith.constant 0 : index
    %c0_17 = arith.constant 0 : index
    %14 = vector.load %arg3[%c0_15, %c0_16, %c0_17] : memref<2x8x64xf32, #tpu.memory_space<vmem>>, vector<1x8x64xf32>
    %15 = vector.shape_cast %14 : vector<1x8x64xf32> to vector<8x64xf32>
    %c0_i32 = arith.constant 0 : i32
    %c8_i32 = arith.constant 8 : i32
    %16 = arith.muli %c0_i32, %c8_i32 : i32
    %17 = tpu.assume_multiple %16, 8 : i32
    %18 = arith.index_cast %17 : i32 to index
    %c0_18 = arith.constant 0 : index
    %19 = vector.load %arg10[%18, %c0_18] : memref<64x256xf32, #tpu.memory_space<vmem>>, vector<8x256xf32>
    %20 = arith.truncf %13 : vector<8x64xf32> to vector<8x64xbf16>
    %cst_19 = arith.constant dense<0.000000e+00> : vector<8x256xf32>
    %21 = tpu.matmul %20, %11, %cst_19 {dimension_numbers = #tpu.dot_dimension_numbers<[1], [0], [0], [1], [0, 0, 1, 1], [], []>} : vector<8x64xbf16>, vector<64x256xbf16>, vector<8x256xf32> -> vector<8x256xf32>
    %22 = arith.addf %19, %21 : vector<8x256xf32>
    %23 = vector.extract_strided_slice %22 {offsets = [0, 0], sizes = [8, 192], strides = [1, 1]} : vector<8x256xf32> to vector<8x192xf32>
    %24 = arith.negf %23 : vector<8x192xf32>
    %25 = math.exp %24 : vector<8x192xf32>
    %cst_20 = arith.constant 1.000000e+00 : f32
    %26 = vector.broadcast %cst_20 : f32 to vector<8x192xf32>
    %27 = arith.addf %26, %25 : vector<8x192xf32>
    %28 = arith.divf %26, %27 : vector<8x192xf32>
    %29 = vector.extract_strided_slice %22 {offsets = [0, 192], sizes = [8, 64], strides = [1, 1]} : vector<8x256xf32> to vector<8x64xf32>
    %30 = math.tanh %29 : vector<8x64xf32>
    %31 = vector.extract_strided_slice %28 {offsets = [0, 0], sizes = [8, 64], strides = [1, 1]} : vector<8x192xf32> to vector<8x64xf32>
    %32 = vector.extract_strided_slice %28 {offsets = [0, 64], sizes = [8, 64], strides = [1, 1]} : vector<8x192xf32> to vector<8x64xf32>
    %33 = vector.extract_strided_slice %28 {offsets = [0, 128], sizes = [8, 64], strides = [1, 1]} : vector<8x192xf32> to vector<8x64xf32>
    %34 = arith.mulf %32, %15 : vector<8x64xf32>
    %35 = arith.mulf %31, %30 : vector<8x64xf32>
    %36 = arith.addf %34, %35 : vector<8x64xf32>
    %37 = math.tanh %36 : vector<8x64xf32>
    %38 = arith.mulf %33, %37 : vector<8x64xf32>
    %39 = arith.index_cast %17 : i32 to index
    %c0_21 = arith.constant 0 : index
    %40 = vector.load %arg11[%39, %c0_21] : memref<64x64xf32, #tpu.memory_space<vmem>>, vector<8x64xf32>
    tpu.vector_store %arg11[%39, %c0_21], %38 {strides = array<i32>} : memref<64x64xf32, #tpu.memory_space<vmem>>, vector<8x64xf32>,
    %c1_i32 = arith.constant 1 : i32
    %c8_i32_22 = arith.constant 8 : i32
    %41 = arith.muli %c1_i32, %c8_i32_22 : i32
    %42 = tpu.assume_multiple %41, 8 : i32
    %43 = arith.index_cast %42 : i32 to index
    %c0_23 = arith.constant 0 : index
    %44 = vector.load %arg10[%43, %c0_23] : memref<64x256xf32, #tpu.memory_space<vmem>>, vector<8x256xf32>
    %45 = arith.truncf %38 : vector<8x64xf32> to vector<8x64xbf16>
    %cst_24 = arith.constant dense<0.000000e+00> : vector<8x256xf32>
    %46 = tpu.matmul %45, %11, %cst_24 {dimension_numbers = #tpu.dot_dimension_numbers<[1], [0], [0], [1], [0, 0, 1, 1], [], []>} : vector<8x64xbf16>, vector<64x256xbf16>, vector<8x256xf32> -> vector<8x256xf32>
    %47 = arith.addf %44, %46 : vector<8x256xf32>
    %48 = vector.extract_strided_slice %47 {offsets = [0, 0], sizes = [8, 192], strides = [1, 1]} : vector<8x256xf32> to vector<8x192xf32>
    %49 = arith.negf %48 : vector<8x192xf32>
    %50 = math.exp %49 : vector<8x192xf32>
    %cst_25 = arith.constant 1.000000e+00 : f32
    %51 = vector.broadcast %cst_25 : f32 to vector<8x192xf32>
    %52 = arith.addf %51, %50 : vector<8x192xf32>
    %53 = arith.divf %51, %52 : vector<8x192xf32>
    %54 = vector.extract_strided_slice %47 {offsets = [0, 192], sizes = [8, 64], strides = [1, 1]} : vector<8x256xf32> to vector<8x64xf32>
    %55 = math.tanh %54 : vector<8x64xf32>
    %56 = vector.extract_strided_slice %53 {offsets = [0, 0], sizes = [8, 64], strides = [1, 1]} : vector<8x192xf32> to vector<8x64xf32>
    %57 = vector.extract_strided_slice %53 {offsets = [0, 64], sizes = [8, 64], strides = [1, 1]} : vector<8x192xf32> to vector<8x64xf32>
    %58 = vector.extract_strided_slice %53 {offsets = [0, 128], sizes = [8, 64], strides = [1, 1]} : vector<8x192xf32> to vector<8x64xf32>
    %59 = arith.mulf %57, %36 : vector<8x64xf32>
    %60 = arith.mulf %56, %55 : vector<8x64xf32>
    %61 = arith.addf %59, %60 : vector<8x64xf32>
    %62 = math.tanh %61 : vector<8x64xf32>
    %63 = arith.mulf %58, %62 : vector<8x64xf32>
    %64 = arith.index_cast %42 : i32 to index
    %c0_26 = arith.constant 0 : index
    %65 = vector.load %arg11[%64, %c0_26] : memref<64x64xf32, #tpu.memory_space<vmem>>, vector<8x64xf32>
    tpu.vector_store %arg11[%64, %c0_26], %63 {strides = array<i32>} : memref<64x64xf32, #tpu.memory_space<vmem>>, vector<8x64xf32>,
    %c2_i32 = arith.constant 2 : i32
    %c8_i32_27 = arith.constant 8 : i32
    %66 = arith.muli %c2_i32, %c8_i32_27 : i32
    %67 = tpu.assume_multiple %66, 8 : i32
    %68 = arith.index_cast %67 : i32 to index
    %c0_28 = arith.constant 0 : index
    %69 = vector.load %arg10[%68, %c0_28] : memref<64x256xf32, #tpu.memory_space<vmem>>, vector<8x256xf32>
    %70 = arith.truncf %63 : vector<8x64xf32> to vector<8x64xbf16>
    %cst_29 = arith.constant dense<0.000000e+00> : vector<8x256xf32>
    %71 = tpu.matmul %70, %11, %cst_29 {dimension_numbers = #tpu.dot_dimension_numbers<[1], [0], [0], [1], [0, 0, 1, 1], [], []>} : vector<8x64xbf16>, vector<64x256xbf16>, vector<8x256xf32> -> vector<8x256xf32>
    %72 = arith.addf %69, %71 : vector<8x256xf32>
    %73 = vector.extract_strided_slice %72 {offsets = [0, 0], sizes = [8, 192], strides = [1, 1]} : vector<8x256xf32> to vector<8x192xf32>
    %74 = arith.negf %73 : vector<8x192xf32>
    %75 = math.exp %74 : vector<8x192xf32>
    %cst_30 = arith.constant 1.000000e+00 : f32
    %76 = vector.broadcast %cst_30 : f32 to vector<8x192xf32>
    %77 = arith.addf %76, %75 : vector<8x192xf32>
    %78 = arith.divf %76, %77 : vector<8x192xf32>
    %79 = vector.extract_strided_slice %72 {offsets = [0, 192], sizes = [8, 64], strides = [1, 1]} : vector<8x256xf32> to vector<8x64xf32>
    %80 = math.tanh %79 : vector<8x64xf32>
    %81 = vector.extract_strided_slice %78 {offsets = [0, 0], sizes = [8, 64], strides = [1, 1]} : vector<8x192xf32> to vector<8x64xf32>
    %82 = vector.extract_strided_slice %78 {offsets = [0, 64], sizes = [8, 64], strides = [1, 1]} : vector<8x192xf32> to vector<8x64xf32>
    %83 = vector.extract_strided_slice %78 {offsets = [0, 128], sizes = [8, 64], strides = [1, 1]} : vector<8x192xf32> to vector<8x64xf32>
    %84 = arith.mulf %82, %61 : vector<8x64xf32>
    %85 = arith.mulf %81, %80 : vector<8x64xf32>
    %86 = arith.addf %84, %85 : vector<8x64xf32>
    %87 = math.tanh %86 : vector<8x64xf32>
    %88 = arith.mulf %83, %87 : vector<8x64xf32>
    %89 = arith.index_cast %67 : i32 to index
    %c0_31 = arith.constant 0 : index
    %90 = vector.load %arg11[%89, %c0_31] : memref<64x64xf32, #tpu.memory_space<vmem>>, vector<8x64xf32>
    tpu.vector_store %arg11[%89, %c0_31], %88 {strides = array<i32>} : memref<64x64xf32, #tpu.memory_space<vmem>>, vector<8x64xf32>,
    %c3_i32 = arith.constant 3 : i32
    %c8_i32_32 = arith.constant 8 : i32
    %91 = arith.muli %c3_i32, %c8_i32_32 : i32
    %92 = tpu.assume_multiple %91, 8 : i32
    %93 = arith.index_cast %92 : i32 to index
    %c0_33 = arith.constant 0 : index
    %94 = vector.load %arg10[%93, %c0_33] : memref<64x256xf32, #tpu.memory_space<vmem>>, vector<8x256xf32>
    %95 = arith.truncf %88 : vector<8x64xf32> to vector<8x64xbf16>
    %cst_34 = arith.constant dense<0.000000e+00> : vector<8x256xf32>
    %96 = tpu.matmul %95, %11, %cst_34 {dimension_numbers = #tpu.dot_dimension_numbers<[1], [0], [0], [1], [0, 0, 1, 1], [], []>} : vector<8x64xbf16>, vector<64x256xbf16>, vector<8x256xf32> -> vector<8x256xf32>
    %97 = arith.addf %94, %96 : vector<8x256xf32>
    %98 = vector.extract_strided_slice %97 {offsets = [0, 0], sizes = [8, 192], strides = [1, 1]} : vector<8x256xf32> to vector<8x192xf32>
    %99 = arith.negf %98 : vector<8x192xf32>
    %100 = math.exp %99 : vector<8x192xf32>
    %cst_35 = arith.constant 1.000000e+00 : f32
    %101 = vector.broadcast %cst_35 : f32 to vector<8x192xf32>
    %102 = arith.addf %101, %100 : vector<8x192xf32>
    %103 = arith.divf %101, %102 : vector<8x192xf32>
    %104 = vector.extract_strided_slice %97 {offsets = [0, 192], sizes = [8, 64], strides = [1, 1]} : vector<8x256xf32> to vector<8x64xf32>
    %105 = math.tanh %104 : vector<8x64xf32>
    %106 = vector.extract_strided_slice %103 {offsets = [0, 0], sizes = [8, 64], strides = [1, 1]} : vector<8x192xf32> to vector<8x64xf32>
    %107 = vector.extract_strided_slice %103 {offsets = [0, 64], sizes = [8, 64], strides = [1, 1]} : vector<8x192xf32> to vector<8x64xf32>
    %108 = vector.extract_strided_slice %103 {offsets = [0, 128], sizes = [8, 64], strides = [1, 1]} : vector<8x192xf32> to vector<8x64xf32>
    %109 = arith.mulf %107, %86 : vector<8x64xf32>
    %110 = arith.mulf %106, %105 : vector<8x64xf32>
    %111 = arith.addf %109, %110 : vector<8x64xf32>
    %112 = math.tanh %111 : vector<8x64xf32>
    %113 = arith.mulf %108, %112 : vector<8x64xf32>
    %114 = arith.index_cast %92 : i32 to index
    %c0_36 = arith.constant 0 : index
    %115 = vector.load %arg11[%114, %c0_36] : memref<64x64xf32, #tpu.memory_space<vmem>>, vector<8x64xf32>
    tpu.vector_store %arg11[%114, %c0_36], %113 {strides = array<i32>} : memref<64x64xf32, #tpu.memory_space<vmem>>, vector<8x64xf32>,
    %c4_i32 = arith.constant 4 : i32
    %c8_i32_37 = arith.constant 8 : i32
    %116 = arith.muli %c4_i32, %c8_i32_37 : i32
    %117 = tpu.assume_multiple %116, 8 : i32
    %118 = arith.index_cast %117 : i32 to index
    %c0_38 = arith.constant 0 : index
    %119 = vector.load %arg10[%118, %c0_38] : memref<64x256xf32, #tpu.memory_space<vmem>>, vector<8x256xf32>
    %120 = arith.truncf %113 : vector<8x64xf32> to vector<8x64xbf16>
    %cst_39 = arith.constant dense<0.000000e+00> : vector<8x256xf32>
    %121 = tpu.matmul %120, %11, %cst_39 {dimension_numbers = #tpu.dot_dimension_numbers<[1], [0], [0], [1], [0, 0, 1, 1], [], []>} : vector<8x64xbf16>, vector<64x256xbf16>, vector<8x256xf32> -> vector<8x256xf32>
    %122 = arith.addf %119, %121 : vector<8x256xf32>
    %123 = vector.extract_strided_slice %122 {offsets = [0, 0], sizes = [8, 192], strides = [1, 1]} : vector<8x256xf32> to vector<8x192xf32>
    %124 = arith.negf %123 : vector<8x192xf32>
    %125 = math.exp %124 : vector<8x192xf32>
    %cst_40 = arith.constant 1.000000e+00 : f32
    %126 = vector.broadcast %cst_40 : f32 to vector<8x192xf32>
    %127 = arith.addf %126, %125 : vector<8x192xf32>
    %128 = arith.divf %126, %127 : vector<8x192xf32>
    %129 = vector.extract_strided_slice %122 {offsets = [0, 192], sizes = [8, 64], strides = [1, 1]} : vector<8x256xf32> to vector<8x64xf32>
    %130 = math.tanh %129 : vector<8x64xf32>
    %131 = vector.extract_strided_slice %128 {offsets = [0, 0], sizes = [8, 64], strides = [1, 1]} : vector<8x192xf32> to vector<8x64xf32>
    %132 = vector.extract_strided_slice %128 {offsets = [0, 64], sizes = [8, 64], strides = [1, 1]} : vector<8x192xf32> to vector<8x64xf32>
    %133 = vector.extract_strided_slice %128 {offsets = [0, 128], sizes = [8, 64], strides = [1, 1]} : vector<8x192xf32> to vector<8x64xf32>
    %134 = arith.mulf %132, %111 : vector<8x64xf32>
    %135 = arith.mulf %131, %130 : vector<8x64xf32>
    %136 = arith.addf %134, %135 : vector<8x64xf32>
    %137 = math.tanh %136 : vector<8x64xf32>
    %138 = arith.mulf %133, %137 : vector<8x64xf32>
    %139 = arith.index_cast %117 : i32 to index
    %c0_41 = arith.constant 0 : index
    %140 = vector.load %arg11[%139, %c0_41] : memref<64x64xf32, #tpu.memory_space<vmem>>, vector<8x64xf32>
    tpu.vector_store %arg11[%139, %c0_41], %138 {strides = array<i32>} : memref<64x64xf32, #tpu.memory_space<vmem>>, vector<8x64xf32>,
    %c5_i32 = arith.constant 5 : i32
    %c8_i32_42 = arith.constant 8 : i32
    %141 = arith.muli %c5_i32, %c8_i32_42 : i32
    %142 = tpu.assume_multiple %141, 8 : i32
    %143 = arith.index_cast %142 : i32 to index
    %c0_43 = arith.constant 0 : index
    %144 = vector.load %arg10[%143, %c0_43] : memref<64x256xf32, #tpu.memory_space<vmem>>, vector<8x256xf32>
    %145 = arith.truncf %138 : vector<8x64xf32> to vector<8x64xbf16>
    %cst_44 = arith.constant dense<0.000000e+00> : vector<8x256xf32>
    %146 = tpu.matmul %145, %11, %cst_44 {dimension_numbers = #tpu.dot_dimension_numbers<[1], [0], [0], [1], [0, 0, 1, 1], [], []>} : vector<8x64xbf16>, vector<64x256xbf16>, vector<8x256xf32> -> vector<8x256xf32>
    %147 = arith.addf %144, %146 : vector<8x256xf32>
    %148 = vector.extract_strided_slice %147 {offsets = [0, 0], sizes = [8, 192], strides = [1, 1]} : vector<8x256xf32> to vector<8x192xf32>
    %149 = arith.negf %148 : vector<8x192xf32>
    %150 = math.exp %149 : vector<8x192xf32>
    %cst_45 = arith.constant 1.000000e+00 : f32
    %151 = vector.broadcast %cst_45 : f32 to vector<8x192xf32>
    %152 = arith.addf %151, %150 : vector<8x192xf32>
    %153 = arith.divf %151, %152 : vector<8x192xf32>
    %154 = vector.extract_strided_slice %147 {offsets = [0, 192], sizes = [8, 64], strides = [1, 1]} : vector<8x256xf32> to vector<8x64xf32>
    %155 = math.tanh %154 : vector<8x64xf32>
    %156 = vector.extract_strided_slice %153 {offsets = [0, 0], sizes = [8, 64], strides = [1, 1]} : vector<8x192xf32> to vector<8x64xf32>
    %157 = vector.extract_strided_slice %153 {offsets = [0, 64], sizes = [8, 64], strides = [1, 1]} : vector<8x192xf32> to vector<8x64xf32>
    %158 = vector.extract_strided_slice %153 {offsets = [0, 128], sizes = [8, 64], strides = [1, 1]} : vector<8x192xf32> to vector<8x64xf32>
    %159 = arith.mulf %157, %136 : vector<8x64xf32>
    %160 = arith.mulf %156, %155 : vector<8x64xf32>
    %161 = arith.addf %159, %160 : vector<8x64xf32>
    %162 = math.tanh %161 : vector<8x64xf32>
    %163 = arith.mulf %158, %162 : vector<8x64xf32>
    %164 = arith.index_cast %142 : i32 to index
    %c0_46 = arith.constant 0 : index
    %165 = vector.load %arg11[%164, %c0_46] : memref<64x64xf32, #tpu.memory_space<vmem>>, vector<8x64xf32>
    tpu.vector_store %arg11[%164, %c0_46], %163 {strides = array<i32>} : memref<64x64xf32, #tpu.memory_space<vmem>>, vector<8x64xf32>,
    %c6_i32 = arith.constant 6 : i32
    %c8_i32_47 = arith.constant 8 : i32
    %166 = arith.muli %c6_i32, %c8_i32_47 : i32
    %167 = tpu.assume_multiple %166, 8 : i32
    %168 = arith.index_cast %167 : i32 to index
    %c0_48 = arith.constant 0 : index
    %169 = vector.load %arg10[%168, %c0_48] : memref<64x256xf32, #tpu.memory_space<vmem>>, vector<8x256xf32>
    %170 = arith.truncf %163 : vector<8x64xf32> to vector<8x64xbf16>
    %cst_49 = arith.constant dense<0.000000e+00> : vector<8x256xf32>
    %171 = tpu.matmul %170, %11, %cst_49 {dimension_numbers = #tpu.dot_dimension_numbers<[1], [0], [0], [1], [0, 0, 1, 1], [], []>} : vector<8x64xbf16>, vector<64x256xbf16>, vector<8x256xf32> -> vector<8x256xf32>
    %172 = arith.addf %169, %171 : vector<8x256xf32>
    %173 = vector.extract_strided_slice %172 {offsets = [0, 0], sizes = [8, 192], strides = [1, 1]} : vector<8x256xf32> to vector<8x192xf32>
    %174 = arith.negf %173 : vector<8x192xf32>
    %175 = math.exp %174 : vector<8x192xf32>
    %cst_50 = arith.constant 1.000000e+00 : f32
    %176 = vector.broadcast %cst_50 : f32 to vector<8x192xf32>
    %177 = arith.addf %176, %175 : vector<8x192xf32>
    %178 = arith.divf %176, %177 : vector<8x192xf32>
    %179 = vector.extract_strided_slice %172 {offsets = [0, 192], sizes = [8, 64], strides = [1, 1]} : vector<8x256xf32> to vector<8x64xf32>
    %180 = math.tanh %179 : vector<8x64xf32>
    %181 = vector.extract_strided_slice %178 {offsets = [0, 0], sizes = [8, 64], strides = [1, 1]} : vector<8x192xf32> to vector<8x64xf32>
    %182 = vector.extract_strided_slice %178 {offsets = [0, 64], sizes = [8, 64], strides = [1, 1]} : vector<8x192xf32> to vector<8x64xf32>
    %183 = vector.extract_strided_slice %178 {offsets = [0, 128], sizes = [8, 64], strides = [1, 1]} : vector<8x192xf32> to vector<8x64xf32>
    %184 = arith.mulf %182, %161 : vector<8x64xf32>
    %185 = arith.mulf %181, %180 : vector<8x64xf32>
    %186 = arith.addf %184, %185 : vector<8x64xf32>
    %187 = math.tanh %186 : vector<8x64xf32>
    %188 = arith.mulf %183, %187 : vector<8x64xf32>
    %189 = arith.index_cast %167 : i32 to index
    %c0_51 = arith.constant 0 : index
    %190 = vector.load %arg11[%189, %c0_51] : memref<64x64xf32, #tpu.memory_space<vmem>>, vector<8x64xf32>
    tpu.vector_store %arg11[%189, %c0_51], %188 {strides = array<i32>} : memref<64x64xf32, #tpu.memory_space<vmem>>, vector<8x64xf32>,
    %c7_i32 = arith.constant 7 : i32
    %c8_i32_52 = arith.constant 8 : i32
    %191 = arith.muli %c7_i32, %c8_i32_52 : i32
    %192 = tpu.assume_multiple %191, 8 : i32
    %193 = arith.index_cast %192 : i32 to index
    %c0_53 = arith.constant 0 : index
    %194 = vector.load %arg10[%193, %c0_53] : memref<64x256xf32, #tpu.memory_space<vmem>>, vector<8x256xf32>
    %195 = arith.truncf %188 : vector<8x64xf32> to vector<8x64xbf16>
    %cst_54 = arith.constant dense<0.000000e+00> : vector<8x256xf32>
    %196 = tpu.matmul %195, %11, %cst_54 {dimension_numbers = #tpu.dot_dimension_numbers<[1], [0], [0], [1], [0, 0, 1, 1], [], []>} : vector<8x64xbf16>, vector<64x256xbf16>, vector<8x256xf32> -> vector<8x256xf32>
    %197 = arith.addf %194, %196 : vector<8x256xf32>
    %198 = vector.extract_strided_slice %197 {offsets = [0, 0], sizes = [8, 192], strides = [1, 1]} : vector<8x256xf32> to vector<8x192xf32>
    %199 = arith.negf %198 : vector<8x192xf32>
    %200 = math.exp %199 : vector<8x192xf32>
    %cst_55 = arith.constant 1.000000e+00 : f32
    %201 = vector.broadcast %cst_55 : f32 to vector<8x192xf32>
    %202 = arith.addf %201, %200 : vector<8x192xf32>
    %203 = arith.divf %201, %202 : vector<8x192xf32>
    %204 = vector.extract_strided_slice %197 {offsets = [0, 192], sizes = [8, 64], strides = [1, 1]} : vector<8x256xf32> to vector<8x64xf32>
    %205 = math.tanh %204 : vector<8x64xf32>
    %206 = vector.extract_strided_slice %203 {offsets = [0, 0], sizes = [8, 64], strides = [1, 1]} : vector<8x192xf32> to vector<8x64xf32>
    %207 = vector.extract_strided_slice %203 {offsets = [0, 64], sizes = [8, 64], strides = [1, 1]} : vector<8x192xf32> to vector<8x64xf32>
    %208 = vector.extract_strided_slice %203 {offsets = [0, 128], sizes = [8, 64], strides = [1, 1]} : vector<8x192xf32> to vector<8x64xf32>
    %209 = arith.mulf %207, %186 : vector<8x64xf32>
    %210 = arith.mulf %206, %205 : vector<8x64xf32>
    %211 = arith.addf %209, %210 : vector<8x64xf32>
    %212 = math.tanh %211 : vector<8x64xf32>
    %213 = arith.mulf %208, %212 : vector<8x64xf32>
    %214 = arith.index_cast %192 : i32 to index
    %c0_56 = arith.constant 0 : index
    %215 = vector.load %arg11[%214, %c0_56] : memref<64x64xf32, #tpu.memory_space<vmem>>, vector<8x64xf32>
    tpu.vector_store %arg11[%214, %c0_56], %213 {strides = array<i32>} : memref<64x64xf32, #tpu.memory_space<vmem>>, vector<8x64xf32>,
    %c8_i32_57 = arith.constant 8 : i32
    %c0_58 = arith.constant 0 : index
    %c0_59 = arith.constant 0 : index
    %216 = vector.load %arg11[%c0_58, %c0_59] : memref<64x64xf32, #tpu.memory_space<vmem>>, vector<64x64xf32>
    %217 = arith.truncf %216 : vector<64x64xf32> to vector<64x64xbf16>
    %c1 = arith.constant 1 : index
    %c0_60 = arith.constant 0 : index
    %c0_61 = arith.constant 0 : index
    %218 = vector.load %arg4[%c1, %c0_60, %c0_61] : memref<2x64x256xbf16, #tpu.memory_space<vmem>>, vector<1x64x256xbf16>
    %219 = vector.shape_cast %218 : vector<1x64x256xbf16> to vector<64x256xbf16>
    %cst_62 = arith.constant dense<0.000000e+00> : vector<64x256xf32>
    %220 = tpu.matmul %217, %219, %cst_62 {dimension_numbers = #tpu.dot_dimension_numbers<[1], [0], [0], [1], [0, 0, 1, 1], [], []>} : vector<64x64xbf16>, vector<64x256xbf16>, vector<64x256xf32> -> vector<64x256xf32>
    %c1_63 = arith.constant 1 : index
    %c0_64 = arith.constant 0 : index
    %c0_65 = arith.constant 0 : index
    %221 = vector.load %arg6[%c1_63, %c0_64, %c0_65] : memref<2x1x256xf32, #tpu.memory_space<vmem>>, vector<1x1x256xf32>
    %222 = vector.shape_cast %221 : vector<1x1x256xf32> to vector<1x256xf32>
    %223 = vector.broadcast %222 : vector<1x256xf32> to vector<64x256xf32>
    %224 = arith.addf %220, %223 : vector<64x256xf32>
    %c0_66 = arith.constant 0 : index
    %c0_67 = arith.constant 0 : index
    %225 = vector.load %arg10[%c0_66, %c0_67] : memref<64x256xf32, #tpu.memory_space<vmem>>, vector<64x256xf32>
    tpu.vector_store %arg10[%c0_66, %c0_67], %224 {strides = array<i32>} : memref<64x256xf32, #tpu.memory_space<vmem>>, vector<64x256xf32>,
    %c1_68 = arith.constant 1 : index
    %c0_69 = arith.constant 0 : index
    %c0_70 = arith.constant 0 : index
    %226 = vector.load %arg5[%c1_68, %c0_69, %c0_70] : memref<2x64x256xbf16, #tpu.memory_space<vmem>>, vector<1x64x256xbf16>
    %227 = vector.shape_cast %226 : vector<1x64x256xbf16> to vector<64x256xbf16>
    %c1_71 = arith.constant 1 : index
    %c0_72 = arith.constant 0 : index
    %c0_73 = arith.constant 0 : index
    %228 = vector.load %arg2[%c1_71, %c0_72, %c0_73] : memref<2x8x64xf32, #tpu.memory_space<vmem>>, vector<1x8x64xf32>
    %229 = vector.shape_cast %228 : vector<1x8x64xf32> to vector<8x64xf32>
    %c1_74 = arith.constant 1 : index
    %c0_75 = arith.constant 0 : index
    %c0_76 = arith.constant 0 : index
    %230 = vector.load %arg3[%c1_74, %c0_75, %c0_76] : memref<2x8x64xf32, #tpu.memory_space<vmem>>, vector<1x8x64xf32>
    %231 = vector.shape_cast %230 : vector<1x8x64xf32> to vector<8x64xf32>
    %c0_i32_77 = arith.constant 0 : i32
    %c8_i32_78 = arith.constant 8 : i32
    %232 = arith.muli %c0_i32_77, %c8_i32_78 : i32
    %233 = tpu.assume_multiple %232, 8 : i32
    %234 = arith.index_cast %233 : i32 to index
    %c0_79 = arith.constant 0 : index
    %235 = vector.load %arg10[%234, %c0_79] : memref<64x256xf32, #tpu.memory_space<vmem>>, vector<8x256xf32>
    %236 = arith.truncf %229 : vector<8x64xf32> to vector<8x64xbf16>
    %cst_80 = arith.constant dense<0.000000e+00> : vector<8x256xf32>
    %237 = tpu.matmul %236, %227, %cst_80 {dimension_numbers = #tpu.dot_dimension_numbers<[1], [0], [0], [1], [0, 0, 1, 1], [], []>} : vector<8x64xbf16>, vector<64x256xbf16>, vector<8x256xf32> -> vector<8x256xf32>
    %238 = arith.addf %235, %237 : vector<8x256xf32>
    %239 = vector.extract_strided_slice %238 {offsets = [0, 0], sizes = [8, 192], strides = [1, 1]} : vector<8x256xf32> to vector<8x192xf32>
    %240 = arith.negf %239 : vector<8x192xf32>
    %241 = math.exp %240 : vector<8x192xf32>
    %cst_81 = arith.constant 1.000000e+00 : f32
    %242 = vector.broadcast %cst_81 : f32 to vector<8x192xf32>
    %243 = arith.addf %242, %241 : vector<8x192xf32>
    %244 = arith.divf %242, %243 : vector<8x192xf32>
    %245 = vector.extract_strided_slice %238 {offsets = [0, 192], sizes = [8, 64], strides = [1, 1]} : vector<8x256xf32> to vector<8x64xf32>
    %246 = math.tanh %245 : vector<8x64xf32>
    %247 = vector.extract_strided_slice %244 {offsets = [0, 0], sizes = [8, 64], strides = [1, 1]} : vector<8x192xf32> to vector<8x64xf32>
    %248 = vector.extract_strided_slice %244 {offsets = [0, 64], sizes = [8, 64], strides = [1, 1]} : vector<8x192xf32> to vector<8x64xf32>
    %249 = vector.extract_strided_slice %244 {offsets = [0, 128], sizes = [8, 64], strides = [1, 1]} : vector<8x192xf32> to vector<8x64xf32>
    %250 = arith.mulf %248, %231 : vector<8x64xf32>
    %251 = arith.mulf %247, %246 : vector<8x64xf32>
    %252 = arith.addf %250, %251 : vector<8x64xf32>
    %253 = math.tanh %252 : vector<8x64xf32>
    %254 = arith.mulf %249, %253 : vector<8x64xf32>
    %255 = arith.index_cast %233 : i32 to index
    %c0_82 = arith.constant 0 : index
    %256 = vector.load %arg11[%255, %c0_82] : memref<64x64xf32, #tpu.memory_space<vmem>>, vector<8x64xf32>
    tpu.vector_store %arg11[%255, %c0_82], %254 {strides = array<i32>} : memref<64x64xf32, #tpu.memory_space<vmem>>, vector<8x64xf32>,
    %c1_i32_83 = arith.constant 1 : i32
    %c8_i32_84 = arith.constant 8 : i32
    %257 = arith.muli %c1_i32_83, %c8_i32_84 : i32
    %258 = tpu.assume_multiple %257, 8 : i32
    %259 = arith.index_cast %258 : i32 to index
    %c0_85 = arith.constant 0 : index
    %260 = vector.load %arg10[%259, %c0_85] : memref<64x256xf32, #tpu.memory_space<vmem>>, vector<8x256xf32>
    %261 = arith.truncf %254 : vector<8x64xf32> to vector<8x64xbf16>
    %cst_86 = arith.constant dense<0.000000e+00> : vector<8x256xf32>
    %262 = tpu.matmul %261, %227, %cst_86 {dimension_numbers = #tpu.dot_dimension_numbers<[1], [0], [0], [1], [0, 0, 1, 1], [], []>} : vector<8x64xbf16>, vector<64x256xbf16>, vector<8x256xf32> -> vector<8x256xf32>
    %263 = arith.addf %260, %262 : vector<8x256xf32>
    %264 = vector.extract_strided_slice %263 {offsets = [0, 0], sizes = [8, 192], strides = [1, 1]} : vector<8x256xf32> to vector<8x192xf32>
    %265 = arith.negf %264 : vector<8x192xf32>
    %266 = math.exp %265 : vector<8x192xf32>
    %cst_87 = arith.constant 1.000000e+00 : f32
    %267 = vector.broadcast %cst_87 : f32 to vector<8x192xf32>
    %268 = arith.addf %267, %266 : vector<8x192xf32>
    %269 = arith.divf %267, %268 : vector<8x192xf32>
    %270 = vector.extract_strided_slice %263 {offsets = [0, 192], sizes = [8, 64], strides = [1, 1]} : vector<8x256xf32> to vector<8x64xf32>
    %271 = math.tanh %270 : vector<8x64xf32>
    %272 = vector.extract_strided_slice %269 {offsets = [0, 0], sizes = [8, 64], strides = [1, 1]} : vector<8x192xf32> to vector<8x64xf32>
    %273 = vector.extract_strided_slice %269 {offsets = [0, 64], sizes = [8, 64], strides = [1, 1]} : vector<8x192xf32> to vector<8x64xf32>
    %274 = vector.extract_strided_slice %269 {offsets = [0, 128], sizes = [8, 64], strides = [1, 1]} : vector<8x192xf32> to vector<8x64xf32>
    %275 = arith.mulf %273, %252 : vector<8x64xf32>
    %276 = arith.mulf %272, %271 : vector<8x64xf32>
    %277 = arith.addf %275, %276 : vector<8x64xf32>
    %278 = math.tanh %277 : vector<8x64xf32>
    %279 = arith.mulf %274, %278 : vector<8x64xf32>
    %280 = arith.index_cast %258 : i32 to index
    %c0_88 = arith.constant 0 : index
    %281 = vector.load %arg11[%280, %c0_88] : memref<64x64xf32, #tpu.memory_space<vmem>>, vector<8x64xf32>
    tpu.vector_store %arg11[%280, %c0_88], %279 {strides = array<i32>} : memref<64x64xf32, #tpu.memory_space<vmem>>, vector<8x64xf32>,
    %c2_i32_89 = arith.constant 2 : i32
    %c8_i32_90 = arith.constant 8 : i32
    %282 = arith.muli %c2_i32_89, %c8_i32_90 : i32
    %283 = tpu.assume_multiple %282, 8 : i32
    %284 = arith.index_cast %283 : i32 to index
    %c0_91 = arith.constant 0 : index
    %285 = vector.load %arg10[%284, %c0_91] : memref<64x256xf32, #tpu.memory_space<vmem>>, vector<8x256xf32>
    %286 = arith.truncf %279 : vector<8x64xf32> to vector<8x64xbf16>
    %cst_92 = arith.constant dense<0.000000e+00> : vector<8x256xf32>
    %287 = tpu.matmul %286, %227, %cst_92 {dimension_numbers = #tpu.dot_dimension_numbers<[1], [0], [0], [1], [0, 0, 1, 1], [], []>} : vector<8x64xbf16>, vector<64x256xbf16>, vector<8x256xf32> -> vector<8x256xf32>
    %288 = arith.addf %285, %287 : vector<8x256xf32>
    %289 = vector.extract_strided_slice %288 {offsets = [0, 0], sizes = [8, 192], strides = [1, 1]} : vector<8x256xf32> to vector<8x192xf32>
    %290 = arith.negf %289 : vector<8x192xf32>
    %291 = math.exp %290 : vector<8x192xf32>
    %cst_93 = arith.constant 1.000000e+00 : f32
    %292 = vector.broadcast %cst_93 : f32 to vector<8x192xf32>
    %293 = arith.addf %292, %291 : vector<8x192xf32>
    %294 = arith.divf %292, %293 : vector<8x192xf32>
    %295 = vector.extract_strided_slice %288 {offsets = [0, 192], sizes = [8, 64], strides = [1, 1]} : vector<8x256xf32> to vector<8x64xf32>
    %296 = math.tanh %295 : vector<8x64xf32>
    %297 = vector.extract_strided_slice %294 {offsets = [0, 0], sizes = [8, 64], strides = [1, 1]} : vector<8x192xf32> to vector<8x64xf32>
    %298 = vector.extract_strided_slice %294 {offsets = [0, 64], sizes = [8, 64], strides = [1, 1]} : vector<8x192xf32> to vector<8x64xf32>
    %299 = vector.extract_strided_slice %294 {offsets = [0, 128], sizes = [8, 64], strides = [1, 1]} : vector<8x192xf32> to vector<8x64xf32>
    %300 = arith.mulf %298, %277 : vector<8x64xf32>
    %301 = arith.mulf %297, %296 : vector<8x64xf32>
    %302 = arith.addf %300, %301 : vector<8x64xf32>
    %303 = math.tanh %302 : vector<8x64xf32>
    %304 = arith.mulf %299, %303 : vector<8x64xf32>
    %305 = arith.index_cast %283 : i32 to index
    %c0_94 = arith.constant 0 : index
    %306 = vector.load %arg11[%305, %c0_94] : memref<64x64xf32, #tpu.memory_space<vmem>>, vector<8x64xf32>
    tpu.vector_store %arg11[%305, %c0_94], %304 {strides = array<i32>} : memref<64x64xf32, #tpu.memory_space<vmem>>, vector<8x64xf32>,
    %c3_i32_95 = arith.constant 3 : i32
    %c8_i32_96 = arith.constant 8 : i32
    %307 = arith.muli %c3_i32_95, %c8_i32_96 : i32
    %308 = tpu.assume_multiple %307, 8 : i32
    %309 = arith.index_cast %308 : i32 to index
    %c0_97 = arith.constant 0 : index
    %310 = vector.load %arg10[%309, %c0_97] : memref<64x256xf32, #tpu.memory_space<vmem>>, vector<8x256xf32>
    %311 = arith.truncf %304 : vector<8x64xf32> to vector<8x64xbf16>
    %cst_98 = arith.constant dense<0.000000e+00> : vector<8x256xf32>
    %312 = tpu.matmul %311, %227, %cst_98 {dimension_numbers = #tpu.dot_dimension_numbers<[1], [0], [0], [1], [0, 0, 1, 1], [], []>} : vector<8x64xbf16>, vector<64x256xbf16>, vector<8x256xf32> -> vector<8x256xf32>
    %313 = arith.addf %310, %312 : vector<8x256xf32>
    %314 = vector.extract_strided_slice %313 {offsets = [0, 0], sizes = [8, 192], strides = [1, 1]} : vector<8x256xf32> to vector<8x192xf32>
    %315 = arith.negf %314 : vector<8x192xf32>
    %316 = math.exp %315 : vector<8x192xf32>
    %cst_99 = arith.constant 1.000000e+00 : f32
    %317 = vector.broadcast %cst_99 : f32 to vector<8x192xf32>
    %318 = arith.addf %317, %316 : vector<8x192xf32>
    %319 = arith.divf %317, %318 : vector<8x192xf32>
    %320 = vector.extract_strided_slice %313 {offsets = [0, 192], sizes = [8, 64], strides = [1, 1]} : vector<8x256xf32> to vector<8x64xf32>
    %321 = math.tanh %320 : vector<8x64xf32>
    %322 = vector.extract_strided_slice %319 {offsets = [0, 0], sizes = [8, 64], strides = [1, 1]} : vector<8x192xf32> to vector<8x64xf32>
    %323 = vector.extract_strided_slice %319 {offsets = [0, 64], sizes = [8, 64], strides = [1, 1]} : vector<8x192xf32> to vector<8x64xf32>
    %324 = vector.extract_strided_slice %319 {offsets = [0, 128], sizes = [8, 64], strides = [1, 1]} : vector<8x192xf32> to vector<8x64xf32>
    %325 = arith.mulf %323, %302 : vector<8x64xf32>
    %326 = arith.mulf %322, %321 : vector<8x64xf32>
    %327 = arith.addf %325, %326 : vector<8x64xf32>
    %328 = math.tanh %327 : vector<8x64xf32>
    %329 = arith.mulf %324, %328 : vector<8x64xf32>
    %330 = arith.index_cast %308 : i32 to index
    %c0_100 = arith.constant 0 : index
    %331 = vector.load %arg11[%330, %c0_100] : memref<64x64xf32, #tpu.memory_space<vmem>>, vector<8x64xf32>
    tpu.vector_store %arg11[%330, %c0_100], %329 {strides = array<i32>} : memref<64x64xf32, #tpu.memory_space<vmem>>, vector<8x64xf32>,
    %c4_i32_101 = arith.constant 4 : i32
    %c8_i32_102 = arith.constant 8 : i32
    %332 = arith.muli %c4_i32_101, %c8_i32_102 : i32
    %333 = tpu.assume_multiple %332, 8 : i32
    %334 = arith.index_cast %333 : i32 to index
    %c0_103 = arith.constant 0 : index
    %335 = vector.load %arg10[%334, %c0_103] : memref<64x256xf32, #tpu.memory_space<vmem>>, vector<8x256xf32>
    %336 = arith.truncf %329 : vector<8x64xf32> to vector<8x64xbf16>
    %cst_104 = arith.constant dense<0.000000e+00> : vector<8x256xf32>
    %337 = tpu.matmul %336, %227, %cst_104 {dimension_numbers = #tpu.dot_dimension_numbers<[1], [0], [0], [1], [0, 0, 1, 1], [], []>} : vector<8x64xbf16>, vector<64x256xbf16>, vector<8x256xf32> -> vector<8x256xf32>
    %338 = arith.addf %335, %337 : vector<8x256xf32>
    %339 = vector.extract_strided_slice %338 {offsets = [0, 0], sizes = [8, 192], strides = [1, 1]} : vector<8x256xf32> to vector<8x192xf32>
    %340 = arith.negf %339 : vector<8x192xf32>
    %341 = math.exp %340 : vector<8x192xf32>
    %cst_105 = arith.constant 1.000000e+00 : f32
    %342 = vector.broadcast %cst_105 : f32 to vector<8x192xf32>
    %343 = arith.addf %342, %341 : vector<8x192xf32>
    %344 = arith.divf %342, %343 : vector<8x192xf32>
    %345 = vector.extract_strided_slice %338 {offsets = [0, 192], sizes = [8, 64], strides = [1, 1]} : vector<8x256xf32> to vector<8x64xf32>
    %346 = math.tanh %345 : vector<8x64xf32>
    %347 = vector.extract_strided_slice %344 {offsets = [0, 0], sizes = [8, 64], strides = [1, 1]} : vector<8x192xf32> to vector<8x64xf32>
    %348 = vector.extract_strided_slice %344 {offsets = [0, 64], sizes = [8, 64], strides = [1, 1]} : vector<8x192xf32> to vector<8x64xf32>
    %349 = vector.extract_strided_slice %344 {offsets = [0, 128], sizes = [8, 64], strides = [1, 1]} : vector<8x192xf32> to vector<8x64xf32>
    %350 = arith.mulf %348, %327 : vector<8x64xf32>
    %351 = arith.mulf %347, %346 : vector<8x64xf32>
    %352 = arith.addf %350, %351 : vector<8x64xf32>
    %353 = math.tanh %352 : vector<8x64xf32>
    %354 = arith.mulf %349, %353 : vector<8x64xf32>
    %355 = arith.index_cast %333 : i32 to index
    %c0_106 = arith.constant 0 : index
    %356 = vector.load %arg11[%355, %c0_106] : memref<64x64xf32, #tpu.memory_space<vmem>>, vector<8x64xf32>
    tpu.vector_store %arg11[%355, %c0_106], %354 {strides = array<i32>} : memref<64x64xf32, #tpu.memory_space<vmem>>, vector<8x64xf32>,
    %c5_i32_107 = arith.constant 5 : i32
    %c8_i32_108 = arith.constant 8 : i32
    %357 = arith.muli %c5_i32_107, %c8_i32_108 : i32
    %358 = tpu.assume_multiple %357, 8 : i32
    %359 = arith.index_cast %358 : i32 to index
    %c0_109 = arith.constant 0 : index
    %360 = vector.load %arg10[%359, %c0_109] : memref<64x256xf32, #tpu.memory_space<vmem>>, vector<8x256xf32>
    %361 = arith.truncf %354 : vector<8x64xf32> to vector<8x64xbf16>
    %cst_110 = arith.constant dense<0.000000e+00> : vector<8x256xf32>
    %362 = tpu.matmul %361, %227, %cst_110 {dimension_numbers = #tpu.dot_dimension_numbers<[1], [0], [0], [1], [0, 0, 1, 1], [], []>} : vector<8x64xbf16>, vector<64x256xbf16>, vector<8x256xf32> -> vector<8x256xf32>
    %363 = arith.addf %360, %362 : vector<8x256xf32>
    %364 = vector.extract_strided_slice %363 {offsets = [0, 0], sizes = [8, 192], strides = [1, 1]} : vector<8x256xf32> to vector<8x192xf32>
    %365 = arith.negf %364 : vector<8x192xf32>
    %366 = math.exp %365 : vector<8x192xf32>
    %cst_111 = arith.constant 1.000000e+00 : f32
    %367 = vector.broadcast %cst_111 : f32 to vector<8x192xf32>
    %368 = arith.addf %367, %366 : vector<8x192xf32>
    %369 = arith.divf %367, %368 : vector<8x192xf32>
    %370 = vector.extract_strided_slice %363 {offsets = [0, 192], sizes = [8, 64], strides = [1, 1]} : vector<8x256xf32> to vector<8x64xf32>
    %371 = math.tanh %370 : vector<8x64xf32>
    %372 = vector.extract_strided_slice %369 {offsets = [0, 0], sizes = [8, 64], strides = [1, 1]} : vector<8x192xf32> to vector<8x64xf32>
    %373 = vector.extract_strided_slice %369 {offsets = [0, 64], sizes = [8, 64], strides = [1, 1]} : vector<8x192xf32> to vector<8x64xf32>
    %374 = vector.extract_strided_slice %369 {offsets = [0, 128], sizes = [8, 64], strides = [1, 1]} : vector<8x192xf32> to vector<8x64xf32>
    %375 = arith.mulf %373, %352 : vector<8x64xf32>
    %376 = arith.mulf %372, %371 : vector<8x64xf32>
    %377 = arith.addf %375, %376 : vector<8x64xf32>
    %378 = math.tanh %377 : vector<8x64xf32>
    %379 = arith.mulf %374, %378 : vector<8x64xf32>
    %380 = arith.index_cast %358 : i32 to index
    %c0_112 = arith.constant 0 : index
    %381 = vector.load %arg11[%380, %c0_112] : memref<64x64xf32, #tpu.memory_space<vmem>>, vector<8x64xf32>
    tpu.vector_store %arg11[%380, %c0_112], %379 {strides = array<i32>} : memref<64x64xf32, #tpu.memory_space<vmem>>, vector<8x64xf32>,
    %c6_i32_113 = arith.constant 6 : i32
    %c8_i32_114 = arith.constant 8 : i32
    %382 = arith.muli %c6_i32_113, %c8_i32_114 : i32
    %383 = tpu.assume_multiple %382, 8 : i32
    %384 = arith.index_cast %383 : i32 to index
    %c0_115 = arith.constant 0 : index
    %385 = vector.load %arg10[%384, %c0_115] : memref<64x256xf32, #tpu.memory_space<vmem>>, vector<8x256xf32>
    %386 = arith.truncf %379 : vector<8x64xf32> to vector<8x64xbf16>
    %cst_116 = arith.constant dense<0.000000e+00> : vector<8x256xf32>
    %387 = tpu.matmul %386, %227, %cst_116 {dimension_numbers = #tpu.dot_dimension_numbers<[1], [0], [0], [1], [0, 0, 1, 1], [], []>} : vector<8x64xbf16>, vector<64x256xbf16>, vector<8x256xf32> -> vector<8x256xf32>
    %388 = arith.addf %385, %387 : vector<8x256xf32>
    %389 = vector.extract_strided_slice %388 {offsets = [0, 0], sizes = [8, 192], strides = [1, 1]} : vector<8x256xf32> to vector<8x192xf32>
    %390 = arith.negf %389 : vector<8x192xf32>
    %391 = math.exp %390 : vector<8x192xf32>
    %cst_117 = arith.constant 1.000000e+00 : f32
    %392 = vector.broadcast %cst_117 : f32 to vector<8x192xf32>
    %393 = arith.addf %392, %391 : vector<8x192xf32>
    %394 = arith.divf %392, %393 : vector<8x192xf32>
    %395 = vector.extract_strided_slice %388 {offsets = [0, 192], sizes = [8, 64], strides = [1, 1]} : vector<8x256xf32> to vector<8x64xf32>
    %396 = math.tanh %395 : vector<8x64xf32>
    %397 = vector.extract_strided_slice %394 {offsets = [0, 0], sizes = [8, 64], strides = [1, 1]} : vector<8x192xf32> to vector<8x64xf32>
    %398 = vector.extract_strided_slice %394 {offsets = [0, 64], sizes = [8, 64], strides = [1, 1]} : vector<8x192xf32> to vector<8x64xf32>
    %399 = vector.extract_strided_slice %394 {offsets = [0, 128], sizes = [8, 64], strides = [1, 1]} : vector<8x192xf32> to vector<8x64xf32>
    %400 = arith.mulf %398, %377 : vector<8x64xf32>
    %401 = arith.mulf %397, %396 : vector<8x64xf32>
    %402 = arith.addf %400, %401 : vector<8x64xf32>
    %403 = math.tanh %402 : vector<8x64xf32>
    %404 = arith.mulf %399, %403 : vector<8x64xf32>
    %405 = arith.index_cast %383 : i32 to index
    %c0_118 = arith.constant 0 : index
    %406 = vector.load %arg11[%405, %c0_118] : memref<64x64xf32, #tpu.memory_space<vmem>>, vector<8x64xf32>
    tpu.vector_store %arg11[%405, %c0_118], %404 {strides = array<i32>} : memref<64x64xf32, #tpu.memory_space<vmem>>, vector<8x64xf32>,
    %c7_i32_119 = arith.constant 7 : i32
    %c8_i32_120 = arith.constant 8 : i32
    %407 = arith.muli %c7_i32_119, %c8_i32_120 : i32
    %408 = tpu.assume_multiple %407, 8 : i32
    %409 = arith.index_cast %408 : i32 to index
    %c0_121 = arith.constant 0 : index
    %410 = vector.load %arg10[%409, %c0_121] : memref<64x256xf32, #tpu.memory_space<vmem>>, vector<8x256xf32>
    %411 = arith.truncf %404 : vector<8x64xf32> to vector<8x64xbf16>
    %cst_122 = arith.constant dense<0.000000e+00> : vector<8x256xf32>
    %412 = tpu.matmul %411, %227, %cst_122 {dimension_numbers = #tpu.dot_dimension_numbers<[1], [0], [0], [1], [0, 0, 1, 1], [], []>} : vector<8x64xbf16>, vector<64x256xbf16>, vector<8x256xf32> -> vector<8x256xf32>
    %413 = arith.addf %410, %412 : vector<8x256xf32>
    %414 = vector.extract_strided_slice %413 {offsets = [0, 0], sizes = [8, 192], strides = [1, 1]} : vector<8x256xf32> to vector<8x192xf32>
    %415 = arith.negf %414 : vector<8x192xf32>
    %416 = math.exp %415 : vector<8x192xf32>
    %cst_123 = arith.constant 1.000000e+00 : f32
    %417 = vector.broadcast %cst_123 : f32 to vector<8x192xf32>
    %418 = arith.addf %417, %416 : vector<8x192xf32>
    %419 = arith.divf %417, %418 : vector<8x192xf32>
    %420 = vector.extract_strided_slice %413 {offsets = [0, 192], sizes = [8, 64], strides = [1, 1]} : vector<8x256xf32> to vector<8x64xf32>
    %421 = math.tanh %420 : vector<8x64xf32>
    %422 = vector.extract_strided_slice %419 {offsets = [0, 0], sizes = [8, 64], strides = [1, 1]} : vector<8x192xf32> to vector<8x64xf32>
    %423 = vector.extract_strided_slice %419 {offsets = [0, 64], sizes = [8, 64], strides = [1, 1]} : vector<8x192xf32> to vector<8x64xf32>
    %424 = vector.extract_strided_slice %419 {offsets = [0, 128], sizes = [8, 64], strides = [1, 1]} : vector<8x192xf32> to vector<8x64xf32>
    %425 = arith.mulf %423, %402 : vector<8x64xf32>
    %426 = arith.mulf %422, %421 : vector<8x64xf32>
    %427 = arith.addf %425, %426 : vector<8x64xf32>
    %428 = math.tanh %427 : vector<8x64xf32>
    %429 = arith.mulf %424, %428 : vector<8x64xf32>
    %430 = arith.index_cast %408 : i32 to index
    %c0_124 = arith.constant 0 : index
    %431 = vector.load %arg11[%430, %c0_124] : memref<64x64xf32, #tpu.memory_space<vmem>>, vector<8x64xf32>
    tpu.vector_store %arg11[%430, %c0_124], %429 {strides = array<i32>} : memref<64x64xf32, #tpu.memory_space<vmem>>, vector<8x64xf32>,
    %c8_i32_125 = arith.constant 8 : i32
    %c0_126 = arith.constant 0 : index
    %c0_127 = arith.constant 0 : index
    %432 = vector.load %arg11[%c0_126, %c0_127] : memref<64x64xf32, #tpu.memory_space<vmem>>, vector<64x64xf32>
    %433 = arith.truncf %432 : vector<64x64xf32> to vector<64x64xbf16>
    %c0_128 = arith.constant 0 : index
    %c0_129 = arith.constant 0 : index
    %434 = vector.load %arg7[%c0_128, %c0_129] : memref<64x128xbf16, #tpu.memory_space<vmem>>, vector<64x128xbf16>
    %cst_130 = arith.constant dense<0.000000e+00> : vector<64x128xf32>
    %435 = tpu.matmul %433, %434, %cst_130 {dimension_numbers = #tpu.dot_dimension_numbers<[1], [0], [0], [1], [0, 0, 1, 1], [], []>} : vector<64x64xbf16>, vector<64x128xbf16>, vector<64x128xf32> -> vector<64x128xf32>
    %c0_131 = arith.constant 0 : index
    %c0_132 = arith.constant 0 : index
    %436 = vector.load %arg8[%c0_131, %c0_132] : memref<1x128xf32, #tpu.memory_space<vmem>>, vector<1x128xf32>
    %437 = vector.broadcast %436 : vector<1x128xf32> to vector<64x128xf32>
    %438 = arith.addf %435, %437 : vector<64x128xf32>
    %c0_133 = arith.constant 0 : index
    %c0_134 = arith.constant 0 : index
    %439 = vector.load %arg9[%c0_133, %c0_134] : memref<64x128xf32, #tpu.memory_space<vmem>>, vector<64x128xf32>
    tpu.vector_store %arg9[%c0_133, %c0_134], %438 {strides = array<i32>} : memref<64x128xf32, #tpu.memory_space<vmem>>, vector<64x128xf32>,
    return
  }
  func.func @transform_0(%arg0: i32) -> (i32, i32) {
    %c0_i32 = arith.constant 0 : i32
    %c0_i32_0 = arith.constant 0 : i32
    %c0_i32_1 = arith.constant 0 : i32
    return %c0_i32, %c0_i32_0 : i32, i32
  }
  func.func @transform_1(%arg0: i32) -> (i32, i32, i32) {
    %c0_i32 = arith.constant 0 : i32
    %c0_i32_0 = arith.constant 0 : i32
    %c0_i32_1 = arith.constant 0 : i32
    %c0_i32_2 = arith.constant 0 : i32
    return %c0_i32, %c0_i32_0, %c0_i32_1 : i32, i32, i32
  }
  func.func @transform_2(%arg0: i32) -> (i32, i32, i32) {
    %c0_i32 = arith.constant 0 : i32
    %c0_i32_0 = arith.constant 0 : i32
    %c0_i32_1 = arith.constant 0 : i32
    %c0_i32_2 = arith.constant 0 : i32
    return %c0_i32, %c0_i32_0, %c0_i32_1 : i32, i32, i32
  }
  func.func @transform_3(%arg0: i32) -> (i32, i32, i32) {
    %c0_i32 = arith.constant 0 : i32
    %c0_i32_0 = arith.constant 0 : i32
    %c0_i32_1 = arith.constant 0 : i32
    %c0_i32_2 = arith.constant 0 : i32
    return %c0_i32, %c0_i32_0, %c0_i32_1 : i32, i32, i32
  }
  func.func @transform_4(%arg0: i32) -> (i32, i32, i32) {
    %c0_i32 = arith.constant 0 : i32
    %c0_i32_0 = arith.constant 0 : i32
    %c0_i32_1 = arith.constant 0 : i32
    %c0_i32_2 = arith.constant 0 : i32
    return %c0_i32, %c0_i32_0, %c0_i32_1 : i32, i32, i32
  }
  func.func @transform_5(%arg0: i32) -> (i32, i32, i32) {
    %c0_i32 = arith.constant 0 : i32
    %c0_i32_0 = arith.constant 0 : i32
    %c0_i32_1 = arith.constant 0 : i32
    %c0_i32_2 = arith.constant 0 : i32
    return %c0_i32, %c0_i32_0, %c0_i32_1 : i32, i32, i32
  }
  func.func @transform_6(%arg0: i32) -> (i32, i32) {
    %c0_i32 = arith.constant 0 : i32
    %c0_i32_0 = arith.constant 0 : i32
    %c0_i32_1 = arith.constant 0 : i32
    return %c0_i32, %c0_i32_0 : i32, i32
  }
  func.func @transform_7(%arg0: i32) -> (i32, i32) {
    %c0_i32 = arith.constant 0 : i32
    %c0_i32_0 = arith.constant 0 : i32
    %c0_i32_1 = arith.constant 0 : i32
    return %c0_i32, %c0_i32_0 : i32, i32
  }
  func.func @transform_8(%arg0: i32) -> (i32, i32) {
    %c0_i32 = arith.constant 0 : i32
    %c0_i32_0 = arith.constant 0 : i32
    %c0_i32_1 = arith.constant 0 : i32
    return %c0_i32, %c0_i32_0 : i32, i32
  }
}

</mosaic_0001>

<llo_original>
// kernel: tpu_custom_call.1
$region0: #{tpu_custom_call.1}
  #allocation0 [shape = 'u32[]', space=smem, size = 0x4, offset = 0x4, fixed_abs, tag = 'smem constant byte address 0x4 - core index']
  #allocation1 [shape = 'u32[144,128]{1,0:T(1,128)}', space=vmem, size = 0x12000, scoped, tag = 'internal scratch']
  #allocation2 [shape = 'f32[64,256]{1,0:T(8,128)}', space=vmem, size = 0x10000, scoped, tag = 'scratch operand']
  #allocation3 [shape = 'f32[64,64]{1,0:T(8,128)}', space=vmem, size = 0x8000, scoped, tag = 'scratch operand']
  %s0 = inlined_call_operand.hbm [shape: f32[64,64], index: 0, kind: input, shape index: {}]
  %s1 = inlined_call_operand.hbm [shape: f32[2,8,64], index: 1, kind: input, shape index: {}]
  %s2 = inlined_call_operand.hbm [shape: f32[2,8,64], index: 2, kind: input, shape index: {}]
  %s3 = inlined_call_operand.hbm [shape: bf16[2,64,256], index: 3, kind: input, shape index: {}]
  %s4 = inlined_call_operand.hbm [shape: bf16[2,64,256], index: 4, kind: input, shape index: {}]
  %s5 = inlined_call_operand.vmem [shape: f32[2,1,256], index: 5, kind: input, shape index: {}]
  %s6 = inlined_call_operand.hbm [shape: bf16[64,128], index: 6, kind: input, shape index: {}]
  %s7 = inlined_call_operand.vmem [shape: f32[1,128], index: 7, kind: input, shape index: {}]
  %s8 = inlined_call_operand.hbm [shape: f32[64,128], index: 8, kind: output, shape index: {}]
  %s9 = sld [smem:[#allocation0]]
  $region66: #{tpu_custom_call.1} parent=0
    _
  %s11 = ssub.s32 1, %s9
  %s12 = scalar_select 0, %s11, %s9
  $region1: #{tpu_custom_call.1} parent=0
    #allocation4 [shape = 'u8[32768]{0}', space=vmem, size = 0x8000, scoped, tag = 'input window, operand 0, single buffered']
    #allocation5 [shape = 's32[1]{0}', space=sflag, size = 0x4, scoped, tag = 'scoped memory for tpu_custom_call.1']
    #allocation6 [shape = 's32[1]{0}', space=sflag, size = 0x4, scoped, tag = 'scoped memory for tpu_custom_call.1']
    #allocation7 [shape = 'u8[8192]{0}', space=vmem, size = 0x2000, scoped, tag = 'input window, operand 1, single buffered']
    #allocation8 [shape = 's32[1]{0}', space=sflag, size = 0x4, scoped, tag = 'scoped memory for tpu_custom_call.1']
    #allocation9 [shape = 'u8[8192]{0}', space=vmem, size = 0x2000, scoped, tag = 'input window, operand 2, single buffered']
    #allocation10 [shape = 'u8[65536]{0}', space=vmem, size = 0x10000, scoped, tag = 'input window, operand 3, single buffered']
    #allocation11 [shape = 's32[1]{0}', space=sflag, size = 0x4, scoped, tag = 'scoped memory for tpu_custom_call.1']
    #allocation12 [shape = 'u8[65536]{0}', space=vmem, size = 0x10000, scoped, tag = 'input window, operand 4, single buffered']
    #allocation13 [shape = 'u8[16384]{0}', space=vmem, size = 0x4000, scoped, tag = 'input window, operand 6, single buffered']
    #allocation14 [shape = 's32[1]{0}', space=sflag, size = 0x4, scoped, tag = 'scoped memory for tpu_custom_call.1']
    #allocation15 [shape = 'u8[32768]{0}', space=vmem, size = 0x8000, scoped, tag = 'output window, operand 0, single buffered']
    %13 = vsyncpa [#allocation5], 0
    %14 = vsyncpa [#allocation8], 0
    %15 = vsyncpa [#allocation11], 0
    %16 = vsyncpa [#allocation14], 0
    %17 = vsyncpa [#allocation6], 0
    // Predicated region
    $region2: #{tpu_custom_call.1} parent=1 // pred_check
      _
    $region3: #{tpu_custom_call.1} parent=1 // pred_check_branch
      %19 = sbr.rel (0) target = $region5
    $region4: #{tpu_custom_call.1} parent=1 // pred_region
      %s21 = ssub.s32 1024, 1024
      %22 = vsyncadd [#allocation5], %s21
      %s23 = sshll.u32 [#allocation4], 4
      %s24 = int_to_ptr.vmem [resolvable:$true] %s23
      %29 = dma.hbm_to_vmem [thread:$0]  %s0, 1024, %s24, [#allocation5], 128, 128, 8
    $region5: #{tpu_custom_call.1} parent=1 // pred_fallthru
      _
    // Predicated region
    $region6: #{tpu_custom_call.1} parent=1 // pred_check
      _
    $region7: #{tpu_custom_call.1} parent=1 // pred_check_branch
      %31 = sbr.rel (0) target = $region9
    $region8: #{tpu_custom_call.1} parent=1 // pred_region
      %s33 = ssub.s32 256, 256
      %34 = vsyncadd [#allocation8], %s33
      %s35 = sshll.u32 [#allocation7], 4
      %s36 = int_to_ptr.vmem [resolvable:$true] %s35
      %41 = dma.hbm_to_vmem [thread:$0]  %s1, 256, %s36, [#allocation8], 128, 128, 8
    $region9: #{tpu_custom_call.1} parent=1 // pred_fallthru
      _
    // Predicated region
    $region10: #{tpu_custom_call.1} parent=1 // pred_check
      _
    $region11: #{tpu_custom_call.1} parent=1 // pred_check_branch
      %43 = sbr.rel (0) target = $region13
    $region12: #{tpu_custom_call.1} parent=1 // pred_region
      %s45 = ssub.s32 256, 256
      %46 = vsyncadd [#allocation8], %s45
      %s47 = sshll.u32 [#allocation9], 4
      %s48 = int_to_ptr.vmem [resolvable:$true] %s47
      %53 = dma.hbm_to_vmem [thread:$0]  %s2, 256, %s48, [#allocation8], 128, 128, 8
    $region13: #{tpu_custom_call.1} parent=1 // pred_fallthru
      _
    // Predicated region
    $region14: #{tpu_custom_call.1} parent=1 // pred_check
      _
    $region15: #{tpu_custom_call.1} parent=1 // pred_check_branch
      %55 = sbr.rel (0) target = $region17
    $region16: #{tpu_custom_call.1} parent=1 // pred_region
      %s57 = ssub.s32 2048, 2048
      %58 = vsyncadd [#allocation11], %s57
      %s59 = sshll.u32 [#allocation10], 4
      %s60 = int_to_ptr.vmem [resolvable:$true] %s59
      %65 = dma.hbm_to_vmem [thread:$0]  %s3, 2048, %s60, [#allocation11], 128, 128, 8
    $region17: #{tpu_custom_call.1} parent=1 // pred_fallthru
      _
    // Predicated region
    $region18: #{tpu_custom_call.1} parent=1 // pred_check
      _
    $region19: #{tpu_custom_call.1} parent=1 // pred_check_branch
      %67 = sbr.rel (0) target = $region21
    $region20: #{tpu_custom_call.1} parent=1 // pred_region
      %s69 = ssub.s32 2048, 2048
      %70 = vsyncadd [#allocation11], %s69
      %s71 = sshll.u32 [#allocation12], 4
      %s72 = int_to_ptr.vmem [resolvable:$true] %s71
      %77 = dma.hbm_to_vmem [thread:$0]  %s4, 2048, %s72, [#allocation11], 128, 128, 8
    $region21: #{tpu_custom_call.1} parent=1 // pred_fallthru
      _
    // Predicated region
    $region22: #{tpu_custom_call.1} parent=1 // pred_check
      _
    $region23: #{tpu_custom_call.1} parent=1 // pred_check_branch
      %79 = sbr.rel (0) target = $region25
    $region24: #{tpu_custom_call.1} parent=1 // pred_region
      _
    $region25: #{tpu_custom_call.1} parent=1 // pred_fallthru
      _
    // Predicated region
    $region26: #{tpu_custom_call.1} parent=1 // pred_check
      _
    $region27: #{tpu_custom_call.1} parent=1 // pred_check_branch
      %81 = sbr.rel (0) target = $region29
    $region28: #{tpu_custom_call.1} parent=1 // pred_region
      %s83 = ssub.s32 512, 512
      %84 = vsyncadd [#allocation14], %s83
      %s85 = sshll.u32 [#allocation13], 4
      %s86 = int_to_ptr.vmem [resolvable:$true] %s85
      %91 = dma.hbm_to_vmem [thread:$0]  %s6, 512, %s86, [#allocation14], 64, 64, 4
    $region29: #{tpu_custom_call.1} parent=1 // pred_fallthru
      _
    // Predicated region
    $region30: #{tpu_custom_call.1} parent=1 // pred_check
      _
    $region31: #{tpu_custom_call.1} parent=1 // pred_check_branch
      %93 = sbr.rel (0) target = $region33
    $region32: #{tpu_custom_call.1} parent=1 // pred_region
      _
    $region33: #{tpu_custom_call.1} parent=1 // pred_fallthru
      _
    // Predicated region
    $region34: #{tpu_custom_call.1} parent=1 // pred_check
      _
    $region35: #{tpu_custom_call.1} parent=1 // pred_check_branch
      %95 = sbr.rel (0) target = $region37
    $region36: #{tpu_custom_call.1} parent=1 // pred_region
      %96 = dma.done [#allocation5], 1024
    $region37: #{tpu_custom_call.1} parent=1 // pred_fallthru
      _
    // Predicated region
    $region38: #{tpu_custom_call.1} parent=1 // pred_check
      _
    $region39: #{tpu_custom_call.1} parent=1 // pred_check_branch
      %98 = sbr.rel (0) target = $region41
    $region40: #{tpu_custom_call.1} parent=1 // pred_region
      %99 = dma.done [#allocation8], 256
    $region41: #{tpu_custom_call.1} parent=1 // pred_fallthru
      _
    // Predicated region
    $region42: #{tpu_custom_call.1} parent=1 // pred_check
      _
    $region43: #{tpu_custom_call.1} parent=1 // pred_check_branch
      %101 = sbr.rel (0) target = $region45
    $region44: #{tpu_custom_call.1} parent=1 // pred_region
      %102 = dma.done [#allocation8], 256
    $region45: #{tpu_custom_call.1} parent=1 // pred_fallthru
      _
    // Predicated region
    $region46: #{tpu_custom_call.1} parent=1 // pred_check
      _
    $region47: #{tpu_custom_call.1} parent=1 // pred_check_branch
      %104 = sbr.rel (0) target = $region49
    $region48: #{tpu_custom_call.1} parent=1 // pred_region
      %105 = dma.done [#allocation11], 2048
    $region49: #{tpu_custom_call.1} parent=1 // pred_fallthru
      _
    // Predicated region
    $region50: #{tpu_custom_call.1} parent=1 // pred_check
      _
    $region51: #{tpu_custom_call.1} parent=1 // pred_check_branch
      %107 = sbr.rel (0) target = $region53
    $region52: #{tpu_custom_call.1} parent=1 // pred_region
      %108 = dma.done [#allocation11], 2048
    $region53: #{tpu_custom_call.1} parent=1 // pred_fallthru
      _
    // Predicated region
    $region54: #{tpu_custom_call.1} parent=1 // pred_check
      _
    $region55: #{tpu_custom_call.1} parent=1 // pred_check_branch
      %110 = sbr.rel (0) target = $region57
    $region56: #{tpu_custom_call.1} parent=1 // pred_region
      %111 = dma.done [#allocation14], 512
    $region57: #{tpu_custom_call.1} parent=1 // pred_fallthru
      _
    %v113 = vld [vmem:[#allocation4] sm:$0xff]
    %v114 = vld [vmem:[#allocation4 + $0x8] sm:$0xff]
    %v115 = vld [vmem:[#allocation4 + $0x10] sm:$0xff]
    %v116 = vld [vmem:[#allocation4 + $0x18] sm:$0xff]
    %v117 = vld [vmem:[#allocation4 + $0x20] sm:$0xff]
    %v118 = vld [vmem:[#allocation4 + $0x28] sm:$0xff]
    %v119 = vld [vmem:[#allocation4 + $0x30] sm:$0xff]
    %v120 = vld [vmem:[#allocation4 + $0x38] sm:$0xff]
    %v121 = vpack.c.bf16 %v114, %v113
    %v122 = vpack.c.bf16 %v116, %v115
    %v123 = vpack.c.bf16 %v118, %v117
    %v124 = vpack.c.bf16 %v120, %v119
    %v125 = vld [vmem:[#allocation10] sm:$0xff]
    %v126 = vld [vmem:[#allocation10 + $0x8] sm:$0xff]
    %v127 = vld [vmem:[#allocation10 + $0x10] sm:$0xff]
    %v128 = vld [vmem:[#allocation10 + $0x18] sm:$0xff]
    %v129 = vld [vmem:[#allocation10 + $0x20] sm:$0xff]
    %v130 = vld [vmem:[#allocation10 + $0x28] sm:$0xff]
    %v131 = vld [vmem:[#allocation10 + $0x30] sm:$0xff]
    %v132 = vld [vmem:[#allocation10 + $0x38] sm:$0xff]
    %v133 = vld [vmem:[%s5] sm:$0x3]
    %v135 = vlaneseq
    %v136 = vshrl.u32 %v135, 7
    %v137 = vsub.s32 0, %v136
    %v138 = vrot.slane %v133, %v137
    %v139 = vlaneseq
    %v140 = vshrl.u32 %v139, 7
    %v141 = vsub.s32 1, %v140
    %v142 = vrot.slane %v133, %v141
    %v153 = vunpack.c.l.b16 %v125
    %v154 = vunpack.c.h.b16 %v125
    %v155 = vunpack.c.l.b16 %v126
    %v156 = vunpack.c.h.b16 %v126
    %v157 = vunpack.c.l.b16 %v127
    %v158 = vunpack.c.h.b16 %v127
    %v159 = vunpack.c.l.b16 %v128
    %v160 = vunpack.c.h.b16 %v128
    %v161 = vunpack.c.l.b16 %v129
    %v162 = vunpack.c.h.b16 %v129
    %v163 = vunpack.c.l.b16 %v130
    %v164 = vunpack.c.h.b16 %v130
    %v165 = vunpack.c.l.b16 %v131
    %v166 = vunpack.c.h.b16 %v131
    %v167 = vunpack.c.l.b16 %v132
    %v168 = vunpack.c.h.b16 %v132
    %v169 = vpack.c.b16 %v155, %v153
    %v170 = vpack.c.b16 %v156, %v154
    %v171 = vpack.c.b16 %v159, %v157
    %v172 = vpack.c.b16 %v160, %v158
    %v173 = vpack.c.b16 %v163, %v161
    %v174 = vpack.c.b16 %v164, %v162
    %v175 = vpack.c.b16 %v167, %v165
    %v176 = vpack.c.b16 %v168, %v166
    %vm185 = vcmask 523264
    %v187 = vsel %vm185, %v121, 0
    %v190 = vsel %vm185, %v122, 0
    %v193 = vsel %vm185, %v123, 0
    %v196 = vsel %vm185, %v124, 0
    %198 = vmatprep.subr.bf16.mxu0 0
    %199 = vmatpush1.bf16.msra.mxu0 0
    %200 = vmatprep.subr.bf16.mxu0 0
    %201 = vmatpush1.bf16.msra.mxu0 0
    %202 = vmatprep.subr.bf16.mxu0 0
    %203 = vmatpush1.bf16.msra.mxu0 0
    %204 = vmatprep.subr.bf16.mxu0 0
    %205 = vmatpush1.bf16.msra.mxu0 0
    %206 = vmatprep.subr.bf16.mxu0 %v176
    %207 = vmatpush1.bf16.msra.mxu0 %v175
    %208 = vmatprep.subr.bf16.mxu0 %v174
    %209 = vmatpush1.bf16.msra.mxu0 %v173
    %210 = vmatprep.subr.bf16.mxu0 %v172
    %211 = vmatpush1.bf16.msra.mxu0 %v171
    %212 = vmatprep.subr.bf16.mxu0 %v170
    %213 = vmatpush1.bf16.msra.mxu0 %v169
    %214 = vmatprep.subr.bf16.mxu0 0
    %215 = vmatpush2.bf16.msra.mxu0 0
    %216 = vmatprep.subr.bf16.mxu0 0
    %217 = vmatpush2.bf16.msra.mxu0 0
    %218 = vmatprep.subr.bf16.mxu0 0
    %219 = vmatpush2.bf16.msra.mxu0 0
    %220 = vmatprep.subr.bf16.mxu0 0
    %221 = vmatpush2.bf16.msra.mxu0 0
    %222 = vmatprep.subr.bf16.mxu0 0
    %223 = vmatpush2.bf16.msra.mxu0 0
    %224 = vmatprep.subr.bf16.mxu0 0
    %225 = vmatpush2.bf16.msra.mxu0 0
    %226 = vmatprep.subr.bf16.mxu0 0
    %227 = vmatpush2.bf16.msra.mxu0 0
    %228 = vmatprep.subr.bf16.mxu0 0
    %229 = vmatpush2.bf16.msra.mxu0 0
    %230 = vmatprep.mubr.bf16.mxu0 0
    %231 = vmatmul.mubr.bf16.gmra.mxu0 %v187
    %v232 = vpop.f32.mrf.mxu0
    %v233 = vadd.f32 %v138, %v232
    %v234 = vpop.f32.mrf.mxu0
    %v235 = vadd.f32 %v142, %v234
    %v236 = vpop.f32.mrf.mxu0
    %v237 = vadd.f32 %v138, %v236
    %v238 = vpop.f32.mrf.mxu0
    %v239 = vadd.f32 %v142, %v238
    %240 = vmatprep.mubr.bf16.mxu0 0
    %241 = vmatmul.mubr.bf16.gmra.mxu0 %v190
    %v242 = vpop.f32.mrf.mxu0
    %v243 = vadd.f32 %v138, %v242
    %v244 = vpop.f32.mrf.mxu0
    %v245 = vadd.f32 %v142, %v244
    %v246 = vpop.f32.mrf.mxu0
    %v247 = vadd.f32 %v138, %v246
    %v248 = vpop.f32.mrf.mxu0
    %v249 = vadd.f32 %v142, %v248
    %250 = vmatprep.mubr.bf16.mxu0 0
    %251 = vmatmul.mubr.bf16.gmra.mxu0 %v193
    %v252 = vpop.f32.mrf.mxu0
    %v253 = vadd.f32 %v138, %v252
    %v254 = vpop.f32.mrf.mxu0
    %v255 = vadd.f32 %v142, %v254
    %v256 = vpop.f32.mrf.mxu0
    %v257 = vadd.f32 %v138, %v256
    %v258 = vpop.f32.mrf.mxu0
    %v259 = vadd.f32 %v142, %v258
    %260 = vmatprep.mubr.bf16.mxu0 0
    %261 = vmatmul.mubr.bf16.gmra.mxu0 %v196
    %v262 = vpop.f32.mrf.mxu0
    %v263 = vadd.f32 %v138, %v262
    %v264 = vpop.f32.mrf.mxu0
    %v265 = vadd.f32 %v142, %v264
    %v266 = vpop.f32.mrf.mxu0
    %v267 = vadd.f32 %v138, %v266
    %v268 = vpop.f32.mrf.mxu0
    %v269 = vadd.f32 %v142, %v268
    %270 = vdwg.mxu0
    %271 = vst [vmem:[#allocation2] sm:$0xff] %v233
    %272 = vst [vmem:[#allocation2 + $0x8] sm:$0xff] %v235
    %273 = vst [vmem:[#allocation2 + $0x10] sm:$0xff] %v237
    %274 = vst [vmem:[#allocation2 + $0x18] sm:$0xff] %v239
    %275 = vst [vmem:[#allocation2 + $0x20] sm:$0xff] %v243
    %276 = vst [vmem:[#allocation2 + $0x28] sm:$0xff] %v245
    %277 = vst [vmem:[#allocation2 + $0x30] sm:$0xff] %v247
    %278 = vst [vmem:[#allocation2 + $0x38] sm:$0xff] %v249
    %279 = vst [vmem:[#allocation2 + $0x40] sm:$0xff] %v253
    %280 = vst [vmem:[#allocation2 + $0x48] sm:$0xff] %v255
    %281 = vst [vmem:[#allocation2 + $0x50] sm:$0xff] %v257
    %282 = vst [vmem:[#allocation2 + $0x58] sm:$0xff] %v259
    %283 = vst [vmem:[#allocation2 + $0x60] sm:$0xff] %v263
    %284 = vst [vmem:[#allocation2 + $0x68] sm:$0xff] %v265
    %285 = vst [vmem:[#allocation2 + $0x70] sm:$0xff] %v267
    %286 = vst [vmem:[#allocation2 + $0x78] sm:$0xff] %v269
    %v287 = vld [vmem:[#allocation12] sm:$0xff]
    %v288 = vld [vmem:[#allocation12 + $0x8] sm:$0xff]
    %v289 = vld [vmem:[#allocation12 + $0x10] sm:$0xff]
    %v290 = vld [vmem:[#allocation12 + $0x18] sm:$0xff]
    %v291 = vld [vmem:[#allocation12 + $0x20] sm:$0xff]
    %v292 = vld [vmem:[#allocation12 + $0x28] sm:$0xff]
    %v293 = vld [vmem:[#allocation12 + $0x30] sm:$0xff]
    %v294 = vld [vmem:[#allocation12 + $0x38] sm:$0xff]
    %v295 = vld [vmem:[#allocation7] sm:$0xff]
    %v296 = vld [vmem:[#allocation9] sm:$0xff]
    %s297 = smul.u32 0, 2
    %s298 = smul.addr %s297, 8
    %s299 = scalar_lea.vmem [#allocation2], %s298
    %v300 = vld [vmem:[%s299] sm:$0xff]
    %v301 = vld [vmem:[%s299 + $0x8] sm:$0xff]
    %v302 = vpack.c.bf16 %v295, %v295
    %v311 = vunpack.c.l.b16 %v287
    %v312 = vunpack.c.h.b16 %v287
    %v313 = vunpack.c.l.b16 %v288
    %v314 = vunpack.c.h.b16 %v288
    %v315 = vunpack.c.l.b16 %v289
    %v316 = vunpack.c.h.b16 %v289
    %v317 = vunpack.c.l.b16 %v290
    %v318 = vunpack.c.h.b16 %v290
    %v319 = vunpack.c.l.b16 %v291
    %v320 = vunpack.c.h.b16 %v291
    %v321 = vunpack.c.l.b16 %v292
    %v322 = vunpack.c.h.b16 %v292
    %v323 = vunpack.c.l.b16 %v293
    %v324 = vunpack.c.h.b16 %v293
    %v325 = vunpack.c.l.b16 %v294
    %v326 = vunpack.c.h.b16 %v294
    %v327 = vpack.c.b16 %v313, %v311
    %v328 = vpack.c.b16 %v314, %v312
    %v329 = vpack.c.b16 %v317, %v315
    %v330 = vpack.c.b16 %v318, %v316
    %v331 = vpack.c.b16 %v321, %v319
    %v332 = vpack.c.b16 %v322, %v320
    %v333 = vpack.c.b16 %v325, %v323
    %v334 = vpack.c.b16 %v326, %v324
    %v344 = vsel %vm185, %v302, 0
    %346 = vmatprep.subr.bf16.mxu0 0
    %347 = vmatpush1.bf16.msra.mxu0 0
    %348 = vmatprep.subr.bf16.mxu0 0
    %349 = vmatpush1.bf16.msra.mxu0 0
    %350 = vmatprep.subr.bf16.mxu0 0
    %351 = vmatpush1.bf16.msra.mxu0 0
    %352 = vmatprep.subr.bf16.mxu0 0
    %353 = vmatpush1.bf16.msra.mxu0 0
    %354 = vmatprep.subr.bf16.mxu0 %v334
    %355 = vmatpush1.bf16.msra.mxu0 %v333
    %356 = vmatprep.subr.bf16.mxu0 %v332
    %357 = vmatpush1.bf16.msra.mxu0 %v331
    %358 = vmatprep.subr.bf16.mxu0 %v330
    %359 = vmatpush1.bf16.msra.mxu0 %v329
    %360 = vmatprep.subr.bf16.mxu0 %v328
    %361 = vmatpush1.bf16.msra.mxu0 %v327
    %362 = vmatprep.subr.bf16.mxu0 0
    %363 = vmatpush2.bf16.msra.mxu0 0
    %364 = vmatprep.subr.bf16.mxu0 0
    %365 = vmatpush2.bf16.msra.mxu0 0
    %366 = vmatprep.subr.bf16.mxu0 0
    %367 = vmatpush2.bf16.msra.mxu0 0
    %368 = vmatprep.subr.bf16.mxu0 0
    %369 = vmatpush2.bf16.msra.mxu0 0
    %370 = vmatprep.subr.bf16.mxu0 0
    %371 = vmatpush2.bf16.msra.mxu0 0
    %372 = vmatprep.subr.bf16.mxu0 0
    %373 = vmatpush2.bf16.msra.mxu0 0
    %374 = vmatprep.subr.bf16.mxu0 0
    %375 = vmatpush2.bf16.msra.mxu0 0
    %376 = vmatprep.subr.bf16.mxu0 0
    %377 = vmatpush2.bf16.msra.mxu0 0
    %378 = vmatprep.mubr.bf16.mxu0 0
    %379 = vmatmul.mubr.bf16.gmra.mxu0 %v344
    %v380 = vpop.f32.mrf.mxu0
    %v381 = vadd.f32 0.0, %v380
    %v382 = vpop.f32.mrf.mxu0
    %v383 = vadd.f32 0.0, %v382
    %v384 = vpop.f32.mrf.mxu0
    %v385 = vpop.f32.mrf.mxu0
    %386 = vdwg.mxu0
    %v387 = vadd.f32 %v300, %v381
    %v388 = vadd.f32 %v301, %v383
    %v389 = vxor.u32 %v387, 2147483648
    %v390 = vxor.u32 %v388, 2147483648
    %v391 = vmul.f32 %v389, 1.442695
    %v392 = vpow.pop %v391
    %v393 = vmul.f32 %v390, 1.442695
    %v394 = vpow.pop %v393
    %v395 = vadd.f32 %v392, 1.0
    %v396 = vadd.f32 %v394, 1.0
    %v397 = vrcp.pop %v395
    %v398 = vmul.f32 1.0, %v397
    %v399 = vrcp.pop %v396
    %v400 = vmul.f32 1.0, %v399
    %v401 = vtanh.pop %v388
    %403 = vrot.lane.b32.xlu0 %v296, 64
    %v404 = vpop.permute.xlu0 %403
    %v406 = vmul.f32 %v398, %v404
    %408 = vrot.lane.b32.xlu0 %v401, 64
    %v409 = vpop.permute.xlu0 %408
    %v411 = vmul.f32 %v398, %v409
    %413 = vrot.lane.b32.xlu0 %v411, 64
    %v414 = vpop.permute.xlu0 %413
    %v416 = vadd.f32 %v406, %v414
    %v417 = vtanh.pop %v416
    %419 = vrot.lane.b32.xlu0 %v417, 64
    %v420 = vpop.permute.xlu0 %419
    %v422 = vmul.f32 %v400, %v420
    %423 = vst.msk [vmem:[#allocation3] sm:$0xff] %vm185, %v422
    %s424 = smul.u32 1, 2
    %s425 = smul.addr %s424, 8
    %s426 = scalar_lea.vmem [#allocation2], %s425
    %v427 = vld [vmem:[%s426] sm:$0xff]
    %v428 = vld [vmem:[%s426 + $0x8] sm:$0xff]
    %v429 = vpack.c.bf16 %v422, %v422
    %v431 = vsel %vm185, %v429, 0
    %433 = vmatprep.subr.bf16.mxu0 0
    %434 = vmatpush1.bf16.msra.mxu0 0
    %435 = vmatprep.subr.bf16.mxu0 0
    %436 = vmatpush1.bf16.msra.mxu0 0
    %437 = vmatprep.subr.bf16.mxu0 0
    %438 = vmatpush1.bf16.msra.mxu0 0
    %439 = vmatprep.subr.bf16.mxu0 0
    %440 = vmatpush1.bf16.msra.mxu0 0
    %441 = vmatprep.subr.bf16.mxu0 %v334
    %442 = vmatpush1.bf16.msra.mxu0 %v333
    %443 = vmatprep.subr.bf16.mxu0 %v332
    %444 = vmatpush1.bf16.msra.mxu0 %v331
    %445 = vmatprep.subr.bf16.mxu0 %v330
    %446 = vmatpush1.bf16.msra.mxu0 %v329
    %447 = vmatprep.subr.bf16.mxu0 %v328
    %448 = vmatpush1.bf16.msra.mxu0 %v327
    %449 = vmatprep.subr.bf16.mxu0 0
    %450 = vmatpush2.bf16.msra.mxu0 0
    %451 = vmatprep.subr.bf16.mxu0 0
    %452 = vmatpush2.bf16.msra.mxu0 0
    %453 = vmatprep.subr.bf16.mxu0 0
    %454 = vmatpush2.bf16.msra.mxu0 0
    %455 = vmatprep.subr.bf16.mxu0 0
    %456 = vmatpush2.bf16.msra.mxu0 0
    %457 = vmatprep.subr.bf16.mxu0 0
    %458 = vmatpush2.bf16.msra.mxu0 0
    %459 = vmatprep.subr.bf16.mxu0 0
    %460 = vmatpush2.bf16.msra.mxu0 0
    %461 = vmatprep.subr.bf16.mxu0 0
    %462 = vmatpush2.bf16.msra.mxu0 0
    %463 = vmatprep.subr.bf16.mxu0 0
    %464 = vmatpush2.bf16.msra.mxu0 0
    %465 = vmatprep.mubr.bf16.mxu0 0
    %466 = vmatmul.mubr.bf16.gmra.mxu0 %v431
    %v467 = vpop.f32.mrf.mxu0
    %v468 = vadd.f32 0.0, %v467
    %v469 = vpop.f32.mrf.mxu0
    %v470 = vadd.f32 0.0, %v469
    %v471 = vpop.f32.mrf.mxu0
    %v472 = vpop.f32.mrf.mxu0
    %473 = vdwg.mxu0
    %v474 = vadd.f32 %v427, %v468
    %v475 = vadd.f32 %v428, %v470
    %v476 = vxor.u32 %v474, 2147483648
    %v477 = vxor.u32 %v475, 2147483648
    %v478 = vmul.f32 %v476, 1.442695
    %v479 = vpow.pop %v478
    %v480 = vmul.f32 %v477, 1.442695
    %v481 = vpow.pop %v480
    %v482 = vadd.f32 %v479, 1.0
    %v483 = vadd.f32 %v481, 1.0
    %v484 = vrcp.pop %v482
    %v485 = vmul.f32 1.0, %v484
    %v486 = vrcp.pop %v483
    %v487 = vmul.f32 1.0, %v486
    %v488 = vtanh.pop %v475
    %v489 = vmul.f32 %v485, %v416
    %491 = vrot.lane.b32.xlu0 %v488, 64
    %v492 = vpop.permute.xlu0 %491
    %v494 = vmul.f32 %v485, %v492
    %496 = vrot.lane.b32.xlu0 %v494, 64
    %v497 = vpop.permute.xlu0 %496
    %v499 = vadd.f32 %v489, %v497
    %v500 = vtanh.pop %v499
    %502 = vrot.lane.b32.xlu0 %v500, 64
    %v503 = vpop.permute.xlu0 %502
    %v505 = vmul.f32 %v487, %v503
    %s506 = scalar_lea.vmem [#allocation3], 8
    %507 = vst.msk [vmem:[%s506] sm:$0xff] %vm185, %v505
    %s508 = smul.u32 2, 2
    %s509 = smul.addr %s508, 8
    %s510 = scalar_lea.vmem [#allocation2], %s509
    %v511 = vld [vmem:[%s510] sm:$0xff]
    %v512 = vld [vmem:[%s510 + $0x8] sm:$0xff]
    %v513 = vpack.c.bf16 %v505, %v505
    %v515 = vsel %vm185, %v513, 0
    %517 = vmatprep.subr.bf16.mxu0 0
    %518 = vmatpush1.bf16.msra.mxu0 0
    %519 = vmatprep.subr.bf16.mxu0 0
    %520 = vmatpush1.bf16.msra.mxu0 0
    %521 = vmatprep.subr.bf16.mxu0 0
    %522 = vmatpush1.bf16.msra.mxu0 0
    %523 = vmatprep.subr.bf16.mxu0 0
    %524 = vmatpush1.bf16.msra.mxu0 0
    %525 = vmatprep.subr.bf16.mxu0 %v334
    %526 = vmatpush1.bf16.msra.mxu0 %v333
    %527 = vmatprep.subr.bf16.mxu0 %v332
    %528 = vmatpush1.bf16.msra.mxu0 %v331
    %529 = vmatprep.subr.bf16.mxu0 %v330
    %530 = vmatpush1.bf16.msra.mxu0 %v329
    %531 = vmatprep.subr.bf16.mxu0 %v328
    %532 = vmatpush1.bf16.msra.mxu0 %v327
    %533 = vmatprep.subr.bf16.mxu0 0
    %534 = vmatpush2.bf16.msra.mxu0 0
    %535 = vmatprep.subr.bf16.mxu0 0
    %536 = vmatpush2.bf16.msra.mxu0 0
    %537 = vmatprep.subr.bf16.mxu0 0
    %538 = vmatpush2.bf16.msra.mxu0 0
    %539 = vmatprep.subr.bf16.mxu0 0
    %540 = vmatpush2.bf16.msra.mxu0 0
    %541 = vmatprep.subr.bf16.mxu0 0
    %542 = vmatpush2.bf16.msra.mxu0 0
    %543 = vmatprep.subr.bf16.mxu0 0
    %544 = vmatpush2.bf16.msra.mxu0 0
    %545 = vmatprep.subr.bf16.mxu0 0
    %546 = vmatpush2.bf16.msra.mxu0 0
    %547 = vmatprep.subr.bf16.mxu0 0
    %548 = vmatpush2.bf16.msra.mxu0 0
    %549 = vmatprep.mubr.bf16.mxu0 0
    %550 = vmatmul.mubr.bf16.gmra.mxu0 %v515
    %v551 = vpop.f32.mrf.mxu0
    %v552 = vadd.f32 0.0, %v551
    %v553 = vpop.f32.mrf.mxu0
    %v554 = vadd.f32 0.0, %v553
    %v555 = vpop.f32.mrf.mxu0
    %v556 = vpop.f32.mrf.mxu0
    %557 = vdwg.mxu0
    %v558 = vadd.f32 %v511, %v552
    %v559 = vadd.f32 %v512, %v554
    %v560 = vxor.u32 %v558, 2147483648
    %v561 = vxor.u32 %v559, 2147483648
    %v562 = vmul.f32 %v560, 1.442695
    %v563 = vpow.pop %v562
    %v564 = vmul.f32 %v561, 1.442695
    %v565 = vpow.pop %v564
    %v566 = vadd.f32 %v563, 1.0
    %v567 = vadd.f32 %v565, 1.0
    %v568 = vrcp.pop %v566
    %v569 = vmul.f32 1.0, %v568
    %v570 = vrcp.pop %v567
    %v571 = vmul.f32 1.0, %v570
    %v572 = vtanh.pop %v559
    %v573 = vmul.f32 %v569, %v499
    %575 = vrot.lane.b32.xlu0 %v572, 64
    %v576 = vpop.permute.xlu0 %575
    %v578 = vmul.f32 %v569, %v576
    %580 = vrot.lane.b32.xlu0 %v578, 64
    %v581 = vpop.permute.xlu0 %580
    %v583 = vadd.f32 %v573, %v581
    %v584 = vtanh.pop %v583
    %586 = vrot.lane.b32.xlu0 %v584, 64
    %v587 = vpop.permute.xlu0 %586
    %v589 = vmul.f32 %v571, %v587
    %s590 = scalar_lea.vmem [#allocation3], 16
    %591 = vst.msk [vmem:[%s590] sm:$0xff] %vm185, %v589
    %s592 = smul.u32 3, 2
    %s593 = smul.addr %s592, 8
    %s594 = scalar_lea.vmem [#allocation2], %s593
    %v595 = vld [vmem:[%s594] sm:$0xff]
    %v596 = vld [vmem:[%s594 + $0x8] sm:$0xff]
    %v597 = vpack.c.bf16 %v589, %v589
    %v599 = vsel %vm185, %v597, 0
    %601 = vmatprep.subr.bf16.mxu0 0
    %602 = vmatpush1.bf16.msra.mxu0 0
    %603 = vmatprep.subr.bf16.mxu0 0
    %604 = vmatpush1.bf16.msra.mxu0 0
    %605 = vmatprep.subr.bf16.mxu0 0
    %606 = vmatpush1.bf16.msra.mxu0 0
    %607 = vmatprep.subr.bf16.mxu0 0
    %608 = vmatpush1.bf16.msra.mxu0 0
    %609 = vmatprep.subr.bf16.mxu0 %v334
    %610 = vmatpush1.bf16.msra.mxu0 %v333
    %611 = vmatprep.subr.bf16.mxu0 %v332
    %612 = vmatpush1.bf16.msra.mxu0 %v331
    %613 = vmatprep.subr.bf16.mxu0 %v330
    %614 = vmatpush1.bf16.msra.mxu0 %v329
    %615 = vmatprep.subr.bf16.mxu0 %v328
    %616 = vmatpush1.bf16.msra.mxu0 %v327
    %617 = vmatprep.subr.bf16.mxu0 0
    %618 = vmatpush2.bf16.msra.mxu0 0
    %619 = vmatprep.subr.bf16.mxu0 0
    %620 = vmatpush2.bf16.msra.mxu0 0
    %621 = vmatprep.subr.bf16.mxu0 0
    %622 = vmatpush2.bf16.msra.mxu0 0
    %623 = vmatprep.subr.bf16.mxu0 0
    %624 = vmatpush2.bf16.msra.mxu0 0
    %625 = vmatprep.subr.bf16.mxu0 0
    %626 = vmatpush2.bf16.msra.mxu0 0
    %627 = vmatprep.subr.bf16.mxu0 0
    %628 = vmatpush2.bf16.msra.mxu0 0
    %629 = vmatprep.subr.bf16.mxu0 0
    %630 = vmatpush2.bf16.msra.mxu0 0
    %631 = vmatprep.subr.bf16.mxu0 0
    %632 = vmatpush2.bf16.msra.mxu0 0
    %633 = vmatprep.mubr.bf16.mxu0 0
    %634 = vmatmul.mubr.bf16.gmra.mxu0 %v599
    %v635 = vpop.f32.mrf.mxu0
    %v636 = vadd.f32 0.0, %v635
    %v637 = vpop.f32.mrf.mxu0
    %v638 = vadd.f32 0.0, %v637
    %v639 = vpop.f32.mrf.mxu0
    %v640 = vpop.f32.mrf.mxu0
    %641 = vdwg.mxu0
    %v642 = vadd.f32 %v595, %v636
    %v643 = vadd.f32 %v596, %v638
    %v644 = vxor.u32 %v642, 2147483648
    %v645 = vxor.u32 %v643, 2147483648
    %v646 = vmul.f32 %v644, 1.442695
    %v647 = vpow.pop %v646
    %v648 = vmul.f32 %v645, 1.442695
    %v649 = vpow.pop %v648
    %v650 = vadd.f32 %v647, 1.0
    %v651 = vadd.f32 %v649, 1.0
    %v652 = vrcp.pop %v650
    %v653 = vmul.f32 1.0, %v652
    %v654 = vrcp.pop %v651
    %v655 = vmul.f32 1.0, %v654
    %v656 = vtanh.pop %v643
    %v657 = vmul.f32 %v653, %v583
    %659 = vrot.lane.b32.xlu0 %v656, 64
    %v660 = vpop.permute.xlu0 %659
    %v662 = vmul.f32 %v653, %v660
    %664 = vrot.lane.b32.xlu0 %v662, 64
    %v665 = vpop.permute.xlu0 %664
    %v667 = vadd.f32 %v657, %v665
    %v668 = vtanh.pop %v667
    %670 = vrot.lane.b32.xlu0 %v668, 64
    %v671 = vpop.permute.xlu0 %670
    %v673 = vmul.f32 %v655, %v671
    %s674 = scalar_lea.vmem [#allocation3], 24
    %675 = vst.msk [vmem:[%s674] sm:$0xff] %vm185, %v673
    %s676 = smul.u32 4, 2
    %s677 = smul.addr %s676, 8
    %s678 = scalar_lea.vmem [#allocation2], %s677
    %v679 = vld [vmem:[%s678] sm:$0xff]
    %v680 = vld [vmem:[%s678 + $0x8] sm:$0xff]
    %v681 = vpack.c.bf16 %v673, %v673
    %v683 = vsel %vm185, %v681, 0
    %685 = vmatprep.subr.bf16.mxu0 0
    %686 = vmatpush1.bf16.msra.mxu0 0
    %687 = vmatprep.subr.bf16.mxu0 0
    %688 = vmatpush1.bf16.msra.mxu0 0
    %689 = vmatprep.subr.bf16.mxu0 0
    %690 = vmatpush1.bf16.msra.mxu0 0
    %691 = vmatprep.subr.bf16.mxu0 0
    %692 = vmatpush1.bf16.msra.mxu0 0
    %693 = vmatprep.subr.bf16.mxu0 %v334
    %694 = vmatpush1.bf16.msra.mxu0 %v333
    %695 = vmatprep.subr.bf16.mxu0 %v332
    %696 = vmatpush1.bf16.msra.mxu0 %v331
    %697 = vmatprep.subr.bf16.mxu0 %v330
    %698 = vmatpush1.bf16.msra.mxu0 %v329
    %699 = vmatprep.subr.bf16.mxu0 %v328
    %700 = vmatpush1.bf16.msra.mxu0 %v327
    %701 = vmatprep.subr.bf16.mxu0 0
    %702 = vmatpush2.bf16.msra.mxu0 0
    %703 = vmatprep.subr.bf16.mxu0 0
    %704 = vmatpush2.bf16.msra.mxu0 0
    %705 = vmatprep.subr.bf16.mxu0 0
    %706 = vmatpush2.bf16.msra.mxu0 0
    %707 = vmatprep.subr.bf16.mxu0 0
    %708 = vmatpush2.bf16.msra.mxu0 0
    %709 = vmatprep.subr.bf16.mxu0 0
    %710 = vmatpush2.bf16.msra.mxu0 0
    %711 = vmatprep.subr.bf16.mxu0 0
    %712 = vmatpush2.bf16.msra.mxu0 0
    %713 = vmatprep.subr.bf16.mxu0 0
    %714 = vmatpush2.bf16.msra.mxu0 0
    %715 = vmatprep.subr.bf16.mxu0 0
    %716 = vmatpush2.bf16.msra.mxu0 0
    %717 = vmatprep.mubr.bf16.mxu0 0
    %718 = vmatmul.mubr.bf16.gmra.mxu0 %v683
    %v719 = vpop.f32.mrf.mxu0
    %v720 = vadd.f32 0.0, %v719
    %v721 = vpop.f32.mrf.mxu0
    %v722 = vadd.f32 0.0, %v721
    %v723 = vpop.f32.mrf.mxu0
    %v724 = vpop.f32.mrf.mxu0
    %725 = vdwg.mxu0
    %v726 = vadd.f32 %v679, %v720
    %v727 = vadd.f32 %v680, %v722
    %v728 = vxor.u32 %v726, 2147483648
    %v729 = vxor.u32 %v727, 2147483648
    %v730 = vmul.f32 %v728, 1.442695
    %v731 = vpow.pop %v730
    %v732 = vmul.f32 %v729, 1.442695
    %v733 = vpow.pop %v732
    %v734 = vadd.f32 %v731, 1.0
    %v735 = vadd.f32 %v733, 1.0
    %v736 = vrcp.pop %v734
    %v737 = vmul.f32 1.0, %v736
    %v738 = vrcp.pop %v735
    %v739 = vmul.f32 1.0, %v738
    %v740 = vtanh.pop %v727
    %v741 = vmul.f32 %v737, %v667
    %743 = vrot.lane.b32.xlu0 %v740, 64
    %v744 = vpop.permute.xlu0 %743
    %v746 = vmul.f32 %v737, %v744
    %748 = vrot.lane.b32.xlu0 %v746, 64
    %v749 = vpop.permute.xlu0 %748
    %v751 = vadd.f32 %v741, %v749
    %v752 = vtanh.pop %v751
    %754 = vrot.lane.b32.xlu0 %v752, 64
    %v755 = vpop.permute.xlu0 %754
    %v757 = vmul.f32 %v739, %v755
    %s758 = scalar_lea.vmem [#allocation3], 32
    %759 = vst.msk [vmem:[%s758] sm:$0xff] %vm185, %v757
    %s760 = smul.u32 5, 2
    %s761 = smul.addr %s760, 8
    %s762 = scalar_lea.vmem [#allocation2], %s761
    %v763 = vld [vmem:[%s762] sm:$0xff]
    %v764 = vld [vmem:[%s762 + $0x8] sm:$0xff]
    %v765 = vpack.c.bf16 %v757, %v757
    %v767 = vsel %vm185, %v765, 0
    %769 = vmatprep.subr.bf16.mxu0 0
    %770 = vmatpush1.bf16.msra.mxu0 0
    %771 = vmatprep.subr.bf16.mxu0 0
    %772 = vmatpush1.bf16.msra.mxu0 0
    %773 = vmatprep.subr.bf16.mxu0 0
    %774 = vmatpush1.bf16.msra.mxu0 0
    %775 = vmatprep.subr.bf16.mxu0 0
    %776 = vmatpush1.bf16.msra.mxu0 0
    %777 = vmatprep.subr.bf16.mxu0 %v334
    %778 = vmatpush1.bf16.msra.mxu0 %v333
    %779 = vmatprep.subr.bf16.mxu0 %v332
    %780 = vmatpush1.bf16.msra.mxu0 %v331
    %781 = vmatprep.subr.bf16.mxu0 %v330
    %782 = vmatpush1.bf16.msra.mxu0 %v329
    %783 = vmatprep.subr.bf16.mxu0 %v328
    %784 = vmatpush1.bf16.msra.mxu0 %v327
    %785 = vmatprep.subr.bf16.mxu0 0
    %786 = vmatpush2.bf16.msra.mxu0 0
    %787 = vmatprep.subr.bf16.mxu0 0
    %788 = vmatpush2.bf16.msra.mxu0 0
    %789 = vmatprep.subr.bf16.mxu0 0
    %790 = vmatpush2.bf16.msra.mxu0 0
    %791 = vmatprep.subr.bf16.mxu0 0
    %792 = vmatpush2.bf16.msra.mxu0 0
    %793 = vmatprep.subr.bf16.mxu0 0
    %794 = vmatpush2.bf16.msra.mxu0 0
    %795 = vmatprep.subr.bf16.mxu0 0
    %796 = vmatpush2.bf16.msra.mxu0 0
    %797 = vmatprep.subr.bf16.mxu0 0
    %798 = vmatpush2.bf16.msra.mxu0 0
    %799 = vmatprep.subr.bf16.mxu0 0
    %800 = vmatpush2.bf16.msra.mxu0 0
    %801 = vmatprep.mubr.bf16.mxu0 0
    %802 = vmatmul.mubr.bf16.gmra.mxu0 %v767
    %v803 = vpop.f32.mrf.mxu0
    %v804 = vadd.f32 0.0, %v803
    %v805 = vpop.f32.mrf.mxu0
    %v806 = vadd.f32 0.0, %v805
    %v807 = vpop.f32.mrf.mxu0
    %v808 = vpop.f32.mrf.mxu0
    %809 = vdwg.mxu0
    %v810 = vadd.f32 %v763, %v804
    %v811 = vadd.f32 %v764, %v806
    %v812 = vxor.u32 %v810, 2147483648
    %v813 = vxor.u32 %v811, 2147483648
    %v814 = vmul.f32 %v812, 1.442695
    %v815 = vpow.pop %v814
    %v816 = vmul.f32 %v813, 1.442695
    %v817 = vpow.pop %v816
    %v818 = vadd.f32 %v815, 1.0
    %v819 = vadd.f32 %v817, 1.0
    %v820 = vrcp.pop %v818
    %v821 = vmul.f32 1.0, %v820
    %v822 = vrcp.pop %v819
    %v823 = vmul.f32 1.0, %v822
    %v824 = vtanh.pop %v811
    %v825 = vmul.f32 %v821, %v751
    %827 = vrot.lane.b32.xlu0 %v824, 64
    %v828 = vpop.permute.xlu0 %827
    %v830 = vmul.f32 %v821, %v828
    %832 = vrot.lane.b32.xlu0 %v830, 64
    %v833 = vpop.permute.xlu0 %832
    %v835 = vadd.f32 %v825, %v833
    %v836 = vtanh.pop %v835
    %838 = vrot.lane.b32.xlu0 %v836, 64
    %v839 = vpop.permute.xlu0 %838
    %v841 = vmul.f32 %v823, %v839
    %s842 = scalar_lea.vmem [#allocation3], 40
    %843 = vst.msk [vmem:[%s842] sm:$0xff] %vm185, %v841
    %s844 = smul.u32 6, 2
    %s845 = smul.addr %s844, 8
    %s846 = scalar_lea.vmem [#allocation2], %s845
    %v847 = vld [vmem:[%s846] sm:$0xff]
    %v848 = vld [vmem:[%s846 + $0x8] sm:$0xff]
    %v849 = vpack.c.bf16 %v841, %v841
    %v851 = vsel %vm185, %v849, 0
    %853 = vmatprep.subr.bf16.mxu0 0
    %854 = vmatpush1.bf16.msra.mxu0 0
    %855 = vmatprep.subr.bf16.mxu0 0
    %856 = vmatpush1.bf16.msra.mxu0 0
    %857 = vmatprep.subr.bf16.mxu0 0
    %858 = vmatpush1.bf16.msra.mxu0 0
    %859 = vmatprep.subr.bf16.mxu0 0
    %860 = vmatpush1.bf16.msra.mxu0 0
    %861 = vmatprep.subr.bf16.mxu0 %v334
    %862 = vmatpush1.bf16.msra.mxu0 %v333
    %863 = vmatprep.subr.bf16.mxu0 %v332
    %864 = vmatpush1.bf16.msra.mxu0 %v331
    %865 = vmatprep.subr.bf16.mxu0 %v330
    %866 = vmatpush1.bf16.msra.mxu0 %v329
    %867 = vmatprep.subr.bf16.mxu0 %v328
    %868 = vmatpush1.bf16.msra.mxu0 %v327
    %869 = vmatprep.subr.bf16.mxu0 0
    %870 = vmatpush2.bf16.msra.mxu0 0
    %871 = vmatprep.subr.bf16.mxu0 0
    %872 = vmatpush2.bf16.msra.mxu0 0
    %873 = vmatprep.subr.bf16.mxu0 0
    %874 = vmatpush2.bf16.msra.mxu0 0
    %875 = vmatprep.subr.bf16.mxu0 0
    %876 = vmatpush2.bf16.msra.mxu0 0
    %877 = vmatprep.subr.bf16.mxu0 0
    %878 = vmatpush2.bf16.msra.mxu0 0
    %879 = vmatprep.subr.bf16.mxu0 0
    %880 = vmatpush2.bf16.msra.mxu0 0
    %881 = vmatprep.subr.bf16.mxu0 0
    %882 = vmatpush2.bf16.msra.mxu0 0
    %883 = vmatprep.subr.bf16.mxu0 0
    %884 = vmatpush2.bf16.msra.mxu0 0
    %885 = vmatprep.mubr.bf16.mxu0 0
    %886 = vmatmul.mubr.bf16.gmra.mxu0 %v851
    %v887 = vpop.f32.mrf.mxu0
    %v888 = vadd.f32 0.0, %v887
    %v889 = vpop.f32.mrf.mxu0
    %v890 = vadd.f32 0.0, %v889
    %v891 = vpop.f32.mrf.mxu0
    %v892 = vpop.f32.mrf.mxu0
    %893 = vdwg.mxu0
    %v894 = vadd.f32 %v847, %v888
    %v895 = vadd.f32 %v848, %v890
    %v896 = vxor.u32 %v894, 2147483648
    %v897 = vxor.u32 %v895, 2147483648
    %v898 = vmul.f32 %v896, 1.442695
    %v899 = vpow.pop %v898
    %v900 = vmul.f32 %v897, 1.442695
    %v901 = vpow.pop %v900
    %v902 = vadd.f32 %v899, 1.0
    %v903 = vadd.f32 %v901, 1.0
    %v904 = vrcp.pop %v902
    %v905 = vmul.f32 1.0, %v904
    %v906 = vrcp.pop %v903
    %v907 = vmul.f32 1.0, %v906
    %v908 = vtanh.pop %v895
    %v909 = vmul.f32 %v905, %v835
    %911 = vrot.lane.b32.xlu0 %v908, 64
    %v912 = vpop.permute.xlu0 %911
    %v914 = vmul.f32 %v905, %v912
    %916 = vrot.lane.b32.xlu0 %v914, 64
    %v917 = vpop.permute.xlu0 %916
    %v919 = vadd.f32 %v909, %v917
    %v920 = vtanh.pop %v919
    %922 = vrot.lane.b32.xlu0 %v920, 64
    %v923 = vpop.permute.xlu0 %922
    %v925 = vmul.f32 %v907, %v923
    %s926 = scalar_lea.vmem [#allocation3], 48
    %927 = vst.msk [vmem:[%s926] sm:$0xff] %vm185, %v925
    %s928 = smul.u32 7, 2
    %s929 = smul.addr %s928, 8
    %s930 = scalar_lea.vmem [#allocation2], %s929
    %v931 = vld [vmem:[%s930] sm:$0xff]
    %v932 = vld [vmem:[%s930 + $0x8] sm:$0xff]
    %v933 = vpack.c.bf16 %v925, %v925
    %v935 = vsel %vm185, %v933, 0
    %937 = vmatprep.subr.bf16.mxu0 0
    %938 = vmatpush1.bf16.msra.mxu0 0
    %939 = vmatprep.subr.bf16.mxu0 0
    %940 = vmatpush1.bf16.msra.mxu0 0
    %941 = vmatprep.subr.bf16.mxu0 0
    %942 = vmatpush1.bf16.msra.mxu0 0
    %943 = vmatprep.subr.bf16.mxu0 0
    %944 = vmatpush1.bf16.msra.mxu0 0
    %945 = vmatprep.subr.bf16.mxu0 %v334
    %946 = vmatpush1.bf16.msra.mxu0 %v333
    %947 = vmatprep.subr.bf16.mxu0 %v332
    %948 = vmatpush1.bf16.msra.mxu0 %v331
    %949 = vmatprep.subr.bf16.mxu0 %v330
    %950 = vmatpush1.bf16.msra.mxu0 %v329
    %951 = vmatprep.subr.bf16.mxu0 %v328
    %952 = vmatpush1.bf16.msra.mxu0 %v327
    %953 = vmatprep.subr.bf16.mxu0 0
    %954 = vmatpush2.bf16.msra.mxu0 0
    %955 = vmatprep.subr.bf16.mxu0 0
    %956 = vmatpush2.bf16.msra.mxu0 0
    %957 = vmatprep.subr.bf16.mxu0 0
    %958 = vmatpush2.bf16.msra.mxu0 0
    %959 = vmatprep.subr.bf16.mxu0 0
    %960 = vmatpush2.bf16.msra.mxu0 0
    %961 = vmatprep.subr.bf16.mxu0 0
    %962 = vmatpush2.bf16.msra.mxu0 0
    %963 = vmatprep.subr.bf16.mxu0 0
    %964 = vmatpush2.bf16.msra.mxu0 0
    %965 = vmatprep.subr.bf16.mxu0 0
    %966 = vmatpush2.bf16.msra.mxu0 0
    %967 = vmatprep.subr.bf16.mxu0 0
    %968 = vmatpush2.bf16.msra.mxu0 0
    %969 = vmatprep.mubr.bf16.mxu0 0
    %970 = vmatmul.mubr.bf16.gmra.mxu0 %v935
    %v971 = vpop.f32.mrf.mxu0
    %v972 = vadd.f32 0.0, %v971
    %v973 = vpop.f32.mrf.mxu0
    %v974 = vadd.f32 0.0, %v973
    %v975 = vpop.f32.mrf.mxu0
    %v976 = vpop.f32.mrf.mxu0
    %977 = vdwg.mxu0
    %v978 = vadd.f32 %v931, %v972
    %v979 = vadd.f32 %v932, %v974
    %v980 = vxor.u32 %v978, 2147483648
    %v981 = vxor.u32 %v979, 2147483648
    %v982 = vmul.f32 %v980, 1.442695
    %v983 = vpow.pop %v982
    %v984 = vmul.f32 %v981, 1.442695
    %v985 = vpow.pop %v984
    %v986 = vadd.f32 %v983, 1.0
    %v987 = vadd.f32 %v985, 1.0
    %v988 = vrcp.pop %v986
    %v989 = vmul.f32 1.0, %v988
    %v990 = vrcp.pop %v987
    %v991 = vmul.f32 1.0, %v990
    %v992 = vtanh.pop %v979
    %v993 = vmul.f32 %v989, %v919
    %995 = vrot.lane.b32.xlu0 %v992, 64
    %v996 = vpop.permute.xlu0 %995
    %v998 = vmul.f32 %v989, %v996
    %1000 = vrot.lane.b32.xlu0 %v998, 64
    %v1001 = vpop.permute.xlu0 %1000
    %v1003 = vadd.f32 %v993, %v1001
    %v1004 = vtanh.pop %v1003
    %1006 = vrot.lane.b32.xlu0 %v1004, 64
    %v1007 = vpop.permute.xlu0 %1006
    %v1009 = vmul.f32 %v991, %v1007
    %s1010 = scalar_lea.vmem [#allocation3], 56
    %1011 = vst.msk [vmem:[%s1010] sm:$0xff] %vm185, %v1009
    %v1012 = vld [vmem:[#allocation3] sm:$0xff]
    %v1013 = vld [vmem:[#allocation3 + $0x8] sm:$0xff]
    %v1014 = vld [vmem:[#allocation3 + $0x10] sm:$0xff]
    %v1015 = vld [vmem:[#allocation3 + $0x18] sm:$0xff]
    %v1016 = vld [vmem:[#allocation3 + $0x20] sm:$0xff]
    %v1017 = vld [vmem:[#allocation3 + $0x28] sm:$0xff]
    %v1018 = vld [vmem:[#allocation3 + $0x30] sm:$0xff]
    %v1019 = vld [vmem:[#allocation3 + $0x38] sm:$0xff]
    %v1020 = vpack.c.bf16 %v1013, %v1012
    %v1021 = vpack.c.bf16 %v1015, %v1014
    %v1022 = vpack.c.bf16 %v1017, %v1016
    %v1023 = vpack.c.bf16 %v1019, %v1018
    %s1024 = scalar_lea.vmem [#allocation10], 64
    %v1025 = vld [vmem:[%s1024] sm:$0xff]
    %v1026 = vld [vmem:[%s1024 + $0x8] sm:$0xff]
    %v1027 = vld [vmem:[%s1024 + $0x10] sm:$0xff]
    %v1028 = vld [vmem:[%s1024 + $0x18] sm:$0xff]
    %v1029 = vld [vmem:[%s1024 + $0x20] sm:$0xff]
    %v1030 = vld [vmem:[%s1024 + $0x28] sm:$0xff]
    %v1031 = vld [vmem:[%s1024 + $0x30] sm:$0xff]
    %v1032 = vld [vmem:[%s1024 + $0x38] sm:$0xff]
    %s1033 = scalar_lea.vmem %s5, 2
    %v1034 = vld [vmem:[%s1033] sm:$0x3]
    %v1036 = vlaneseq
    %v1037 = vshrl.u32 %v1036, 7
    %v1038 = vsub.s32 0, %v1037
    %v1039 = vrot.slane %v1034, %v1038
    %v1040 = vlaneseq
    %v1041 = vshrl.u32 %v1040, 7
    %v1042 = vsub.s32 1, %v1041
    %v1043 = vrot.slane %v1034, %v1042
    %v1054 = vunpack.c.l.b16 %v1025
    %v1055 = vunpack.c.h.b16 %v1025
    %v1056 = vunpack.c.l.b16 %v1026
    %v1057 = vunpack.c.h.b16 %v1026
    %v1058 = vunpack.c.l.b16 %v1027
    %v1059 = vunpack.c.h.b16 %v1027
    %v1060 = vunpack.c.l.b16 %v1028
    %v1061 = vunpack.c.h.b16 %v1028
    %v1062 = vunpack.c.l.b16 %v1029
    %v1063 = vunpack.c.h.b16 %v1029
    %v1064 = vunpack.c.l.b16 %v1030
    %v1065 = vunpack.c.h.b16 %v1030
    %v1066 = vunpack.c.l.b16 %v1031
    %v1067 = vunpack.c.h.b16 %v1031
    %v1068 = vunpack.c.l.b16 %v1032
    %v1069 = vunpack.c.h.b16 %v1032
    %v1070 = vpack.c.b16 %v1056, %v1054
    %v1071 = vpack.c.b16 %v1057, %v1055
    %v1072 = vpack.c.b16 %v1060, %v1058
    %v1073 = vpack.c.b16 %v1061, %v1059
    %v1074 = vpack.c.b16 %v1064, %v1062
    %v1075 = vpack.c.b16 %v1065, %v1063
    %v1076 = vpack.c.b16 %v1068, %v1066
    %v1077 = vpack.c.b16 %v1069, %v1067
    %v1087 = vsel %vm185, %v1020, 0
    %v1090 = vsel %vm185, %v1021, 0
    %v1093 = vsel %vm185, %v1022, 0
    %v1096 = vsel %vm185, %v1023, 0
    %1098 = vmatprep.subr.bf16.mxu0 0
    %1099 = vmatpush1.bf16.msra.mxu0 0
    %1100 = vmatprep.subr.bf16.mxu0 0
    %1101 = vmatpush1.bf16.msra.mxu0 0
    %1102 = vmatprep.subr.bf16.mxu0 0
    %1103 = vmatpush1.bf16.msra.mxu0 0
    %1104 = vmatprep.subr.bf16.mxu0 0
    %1105 = vmatpush1.bf16.msra.mxu0 0
    %1106 = vmatprep.subr.bf16.mxu0 %v1077
    %1107 = vmatpush1.bf16.msra.mxu0 %v1076
    %1108 = vmatprep.subr.bf16.mxu0 %v1075
    %1109 = vmatpush1.bf16.msra.mxu0 %v1074
    %1110 = vmatprep.subr.bf16.mxu0 %v1073
    %1111 = vmatpush1.bf16.msra.mxu0 %v1072
    %1112 = vmatprep.subr.bf16.mxu0 %v1071
    %1113 = vmatpush1.bf16.msra.mxu0 %v1070
    %1114 = vmatprep.subr.bf16.mxu0 0
    %1115 = vmatpush2.bf16.msra.mxu0 0
    %1116 = vmatprep.subr.bf16.mxu0 0
    %1117 = vmatpush2.bf16.msra.mxu0 0
    %1118 = vmatprep.subr.bf16.mxu0 0
    %1119 = vmatpush2.bf16.msra.mxu0 0
    %1120 = vmatprep.subr.bf16.mxu0 0
    %1121 = vmatpush2.bf16.msra.mxu0 0
    %1122 = vmatprep.subr.bf16.mxu0 0
    %1123 = vmatpush2.bf16.msra.mxu0 0
    %1124 = vmatprep.subr.bf16.mxu0 0
    %1125 = vmatpush2.bf16.msra.mxu0 0
    %1126 = vmatprep.subr.bf16.mxu0 0
    %1127 = vmatpush2.bf16.msra.mxu0 0
    %1128 = vmatprep.subr.bf16.mxu0 0
    %1129 = vmatpush2.bf16.msra.mxu0 0
    %1130 = vmatprep.mubr.bf16.mxu0 0
    %1131 = vmatmul.mubr.bf16.gmra.mxu0 %v1087
    %v1132 = vpop.f32.mrf.mxu0
    %v1133 = vadd.f32 %v1039, %v1132
    %v1134 = vpop.f32.mrf.mxu0
    %v1135 = vadd.f32 %v1043, %v1134
    %v1136 = vpop.f32.mrf.mxu0
    %v1137 = vadd.f32 %v1039, %v1136
    %v1138 = vpop.f32.mrf.mxu0
    %v1139 = vadd.f32 %v1043, %v1138
    %1140 = vmatprep.mubr.bf16.mxu0 0
    %1141 = vmatmul.mubr.bf16.gmra.mxu0 %v1090
    %v1142 = vpop.f32.mrf.mxu0
    %v1143 = vadd.f32 %v1039, %v1142
    %v1144 = vpop.f32.mrf.mxu0
    %v1145 = vadd.f32 %v1043, %v1144
    %v1146 = vpop.f32.mrf.mxu0
    %v1147 = vadd.f32 %v1039, %v1146
    %v1148 = vpop.f32.mrf.mxu0
    %v1149 = vadd.f32 %v1043, %v1148
    %1150 = vmatprep.mubr.bf16.mxu0 0
    %1151 = vmatmul.mubr.bf16.gmra.mxu0 %v1093
    %v1152 = vpop.f32.mrf.mxu0
    %v1153 = vadd.f32 %v1039, %v1152
    %v1154 = vpop.f32.mrf.mxu0
    %v1155 = vadd.f32 %v1043, %v1154
    %v1156 = vpop.f32.mrf.mxu0
    %v1157 = vadd.f32 %v1039, %v1156
    %v1158 = vpop.f32.mrf.mxu0
    %v1159 = vadd.f32 %v1043, %v1158
    %1160 = vmatprep.mubr.bf16.mxu0 0
    %1161 = vmatmul.mubr.bf16.gmra.mxu0 %v1096
    %v1162 = vpop.f32.mrf.mxu0
    %v1163 = vadd.f32 %v1039, %v1162
    %v1164 = vpop.f32.mrf.mxu0
    %v1165 = vadd.f32 %v1043, %v1164
    %v1166 = vpop.f32.mrf.mxu0
    %v1167 = vadd.f32 %v1039, %v1166
    %v1168 = vpop.f32.mrf.mxu0
    %v1169 = vadd.f32 %v1043, %v1168
    %1170 = vdwg.mxu0
    %1171 = vst [vmem:[#allocation2] sm:$0xff] %v1133
    %1172 = vst [vmem:[#allocation2 + $0x8] sm:$0xff] %v1135
    %1173 = vst [vmem:[#allocation2 + $0x10] sm:$0xff] %v1137
    %1174 = vst [vmem:[#allocation2 + $0x18] sm:$0xff] %v1139
    %1175 = vst [vmem:[#allocation2 + $0x20] sm:$0xff] %v1143
    %1176 = vst [vmem:[#allocation2 + $0x28] sm:$0xff] %v1145
    %1177 = vst [vmem:[#allocation2 + $0x30] sm:$0xff] %v1147
    %1178 = vst [vmem:[#allocation2 + $0x38] sm:$0xff] %v1149
    %1179 = vst [vmem:[#allocation2 + $0x40] sm:$0xff] %v1153
    %1180 = vst [vmem:[#allocation2 + $0x48] sm:$0xff] %v1155
    %1181 = vst [vmem:[#allocation2 + $0x50] sm:$0xff] %v1157
    %1182 = vst [vmem:[#allocation2 + $0x58] sm:$0xff] %v1159
    %1183 = vst [vmem:[#allocation2 + $0x60] sm:$0xff] %v1163
    %1184 = vst [vmem:[#allocation2 + $0x68] sm:$0xff] %v1165
    %1185 = vst [vmem:[#allocation2 + $0x70] sm:$0xff] %v1167
    %1186 = vst [vmem:[#allocation2 + $0x78] sm:$0xff] %v1169
    %s1187 = scalar_lea.vmem [#allocation12], 64
    %v1188 = vld [vmem:[%s1187] sm:$0xff]
    %v1189 = vld [vmem:[%s1187 + $0x8] sm:$0xff]
    %v1190 = vld [vmem:[%s1187 + $0x10] sm:$0xff]
    %v1191 = vld [vmem:[%s1187 + $0x18] sm:$0xff]
    %v1192 = vld [vmem:[%s1187 + $0x20] sm:$0xff]
    %v1193 = vld [vmem:[%s1187 + $0x28] sm:$0xff]
    %v1194 = vld [vmem:[%s1187 + $0x30] sm:$0xff]
    %v1195 = vld [vmem:[%s1187 + $0x38] sm:$0xff]
    %s1196 = scalar_lea.vmem [#allocation7], 8
    %v1197 = vld [vmem:[%s1196] sm:$0xff]
    %s1198 = scalar_lea.vmem [#allocation9], 8
    %v1199 = vld [vmem:[%s1198] sm:$0xff]
    %v1200 = vld [vmem:[%s299] sm:$0xff]
    %v1201 = vld [vmem:[%s299 + $0x8] sm:$0xff]
    %v1202 = vpack.c.bf16 %v1197, %v1197
    %v1211 = vunpack.c.l.b16 %v1188
    %v1212 = vunpack.c.h.b16 %v1188
    %v1213 = vunpack.c.l.b16 %v1189
    %v1214 = vunpack.c.h.b16 %v1189
    %v1215 = vunpack.c.l.b16 %v1190
    %v1216 = vunpack.c.h.b16 %v1190
    %v1217 = vunpack.c.l.b16 %v1191
    %v1218 = vunpack.c.h.b16 %v1191
    %v1219 = vunpack.c.l.b16 %v1192
    %v1220 = vunpack.c.h.b16 %v1192
    %v1221 = vunpack.c.l.b16 %v1193
    %v1222 = vunpack.c.h.b16 %v1193
    %v1223 = vunpack.c.l.b16 %v1194
    %v1224 = vunpack.c.h.b16 %v1194
    %v1225 = vunpack.c.l.b16 %v1195
    %v1226 = vunpack.c.h.b16 %v1195
    %v1227 = vpack.c.b16 %v1213, %v1211
    %v1228 = vpack.c.b16 %v1214, %v1212
    %v1229 = vpack.c.b16 %v1217, %v1215
    %v1230 = vpack.c.b16 %v1218, %v1216
    %v1231 = vpack.c.b16 %v1221, %v1219
    %v1232 = vpack.c.b16 %v1222, %v1220
    %v1233 = vpack.c.b16 %v1225, %v1223
    %v1234 = vpack.c.b16 %v1226, %v1224
    %v1244 = vsel %vm185, %v1202, 0
    %1246 = vmatprep.subr.bf16.mxu0 0
    %1247 = vmatpush1.bf16.msra.mxu0 0
    %1248 = vmatprep.subr.bf16.mxu0 0
    %1249 = vmatpush1.bf16.msra.mxu0 0
    %1250 = vmatprep.subr.bf16.mxu0 0
    %1251 = vmatpush1.bf16.msra.mxu0 0
    %1252 = vmatprep.subr.bf16.mxu0 0
    %1253 = vmatpush1.bf16.msra.mxu0 0
    %1254 = vmatprep.subr.bf16.mxu0 %v1234
    %1255 = vmatpush1.bf16.msra.mxu0 %v1233
    %1256 = vmatprep.subr.bf16.mxu0 %v1232
    %1257 = vmatpush1.bf16.msra.mxu0 %v1231
    %1258 = vmatprep.subr.bf16.mxu0 %v1230
    %1259 = vmatpush1.bf16.msra.mxu0 %v1229
    %1260 = vmatprep.subr.bf16.mxu0 %v1228
    %1261 = vmatpush1.bf16.msra.mxu0 %v1227
    %1262 = vmatprep.subr.bf16.mxu0 0
    %1263 = vmatpush2.bf16.msra.mxu0 0
    %1264 = vmatprep.subr.bf16.mxu0 0
    %1265 = vmatpush2.bf16.msra.mxu0 0
    %1266 = vmatprep.subr.bf16.mxu0 0
    %1267 = vmatpush2.bf16.msra.mxu0 0
    %1268 = vmatprep.subr.bf16.mxu0 0
    %1269 = vmatpush2.bf16.msra.mxu0 0
    %1270 = vmatprep.subr.bf16.mxu0 0
    %1271 = vmatpush2.bf16.msra.mxu0 0
    %1272 = vmatprep.subr.bf16.mxu0 0
    %1273 = vmatpush2.bf16.msra.mxu0 0
    %1274 = vmatprep.subr.bf16.mxu0 0
    %1275 = vmatpush2.bf16.msra.mxu0 0
    %1276 = vmatprep.subr.bf16.mxu0 0
    %1277 = vmatpush2.bf16.msra.mxu0 0
    %1278 = vmatprep.mubr.bf16.mxu0 0
    %1279 = vmatmul.mubr.bf16.gmra.mxu0 %v1244
    %v1280 = vpop.f32.mrf.mxu0
    %v1281 = vadd.f32 0.0, %v1280
    %v1282 = vpop.f32.mrf.mxu0
    %v1283 = vadd.f32 0.0, %v1282
    %v1284 = vpop.f32.mrf.mxu0
    %v1285 = vpop.f32.mrf.mxu0
    %1286 = vdwg.mxu0
    %v1287 = vadd.f32 %v1200, %v1281
    %v1288 = vadd.f32 %v1201, %v1283
    %v1289 = vxor.u32 %v1287, 2147483648
    %v1290 = vxor.u32 %v1288, 2147483648
    %v1291 = vmul.f32 %v1289, 1.442695
    %v1292 = vpow.pop %v1291
    %v1293 = vmul.f32 %v1290, 1.442695
    %v1294 = vpow.pop %v1293
    %v1295 = vadd.f32 %v1292, 1.0
    %v1296 = vadd.f32 %v1294, 1.0
    %v1297 = vrcp.pop %v1295
    %v1298 = vmul.f32 1.0, %v1297
    %v1299 = vrcp.pop %v1296
    %v1300 = vmul.f32 1.0, %v1299
    %v1301 = vtanh.pop %v1288
    %1303 = vrot.lane.b32.xlu0 %v1199, 64
    %v1304 = vpop.permute.xlu0 %1303
    %v1306 = vmul.f32 %v1298, %v1304
    %1308 = vrot.lane.b32.xlu0 %v1301, 64
    %v1309 = vpop.permute.xlu0 %1308
    %v1311 = vmul.f32 %v1298, %v1309
    %1313 = vrot.lane.b32.xlu0 %v1311, 64
    %v1314 = vpop.permute.xlu0 %1313
    %v1316 = vadd.f32 %v1306, %v1314
    %v1317 = vtanh.pop %v1316
    %1319 = vrot.lane.b32.xlu0 %v1317, 64
    %v1320 = vpop.permute.xlu0 %1319
    %v1322 = vmul.f32 %v1300, %v1320
    %1323 = vst.msk [vmem:[#allocation3] sm:$0xff] %vm185, %v1322
    %v1324 = vld [vmem:[%s426] sm:$0xff]
    %v1325 = vld [vmem:[%s426 + $0x8] sm:$0xff]
    %v1326 = vpack.c.bf16 %v1322, %v1322
    %v1328 = vsel %vm185, %v1326, 0
    %1330 = vmatprep.subr.bf16.mxu0 0
    %1331 = vmatpush1.bf16.msra.mxu0 0
    %1332 = vmatprep.subr.bf16.mxu0 0
    %1333 = vmatpush1.bf16.msra.mxu0 0
    %1334 = vmatprep.subr.bf16.mxu0 0
    %1335 = vmatpush1.bf16.msra.mxu0 0
    %1336 = vmatprep.subr.bf16.mxu0 0
    %1337 = vmatpush1.bf16.msra.mxu0 0
    %1338 = vmatprep.subr.bf16.mxu0 %v1234
    %1339 = vmatpush1.bf16.msra.mxu0 %v1233
    %1340 = vmatprep.subr.bf16.mxu0 %v1232
    %1341 = vmatpush1.bf16.msra.mxu0 %v1231
    %1342 = vmatprep.subr.bf16.mxu0 %v1230
    %1343 = vmatpush1.bf16.msra.mxu0 %v1229
    %1344 = vmatprep.subr.bf16.mxu0 %v1228
    %1345 = vmatpush1.bf16.msra.mxu0 %v1227
    %1346 = vmatprep.subr.bf16.mxu0 0
    %1347 = vmatpush2.bf16.msra.mxu0 0
    %1348 = vmatprep.subr.bf16.mxu0 0
    %1349 = vmatpush2.bf16.msra.mxu0 0
    %1350 = vmatprep.subr.bf16.mxu0 0
    %1351 = vmatpush2.bf16.msra.mxu0 0
    %1352 = vmatprep.subr.bf16.mxu0 0
    %1353 = vmatpush2.bf16.msra.mxu0 0
    %1354 = vmatprep.subr.bf16.mxu0 0
    %1355 = vmatpush2.bf16.msra.mxu0 0
    %1356 = vmatprep.subr.bf16.mxu0 0
    %1357 = vmatpush2.bf16.msra.mxu0 0
    %1358 = vmatprep.subr.bf16.mxu0 0
    %1359 = vmatpush2.bf16.msra.mxu0 0
    %1360 = vmatprep.subr.bf16.mxu0 0
    %1361 = vmatpush2.bf16.msra.mxu0 0
    %1362 = vmatprep.mubr.bf16.mxu0 0
    %1363 = vmatmul.mubr.bf16.gmra.mxu0 %v1328
    %v1364 = vpop.f32.mrf.mxu0
    %v1365 = vadd.f32 0.0, %v1364
    %v1366 = vpop.f32.mrf.mxu0
    %v1367 = vadd.f32 0.0, %v1366
    %v1368 = vpop.f32.mrf.mxu0
    %v1369 = vpop.f32.mrf.mxu0
    %1370 = vdwg.mxu0
    %v1371 = vadd.f32 %v1324, %v1365
    %v1372 = vadd.f32 %v1325, %v1367
    %v1373 = vxor.u32 %v1371, 2147483648
    %v1374 = vxor.u32 %v1372, 2147483648
    %v1375 = vmul.f32 %v1373, 1.442695
    %v1376 = vpow.pop %v1375
    %v1377 = vmul.f32 %v1374, 1.442695
    %v1378 = vpow.pop %v1377
    %v1379 = vadd.f32 %v1376, 1.0
    %v1380 = vadd.f32 %v1378, 1.0
    %v1381 = vrcp.pop %v1379
    %v1382 = vmul.f32 1.0, %v1381
    %v1383 = vrcp.pop %v1380
    %v1384 = vmul.f32 1.0, %v1383
    %v1385 = vtanh.pop %v1372
    %v1386 = vmul.f32 %v1382, %v1316
    %1388 = vrot.lane.b32.xlu0 %v1385, 64
    %v1389 = vpop.permute.xlu0 %1388
    %v1391 = vmul.f32 %v1382, %v1389
    %1393 = vrot.lane.b32.xlu0 %v1391, 64
    %v1394 = vpop.permute.xlu0 %1393
    %v1396 = vadd.f32 %v1386, %v1394
    %v1397 = vtanh.pop %v1396
    %1399 = vrot.lane.b32.xlu0 %v1397, 64
    %v1400 = vpop.permute.xlu0 %1399
    %v1402 = vmul.f32 %v1384, %v1400
    %1403 = vst.msk [vmem:[%s506] sm:$0xff] %vm185, %v1402
    %v1404 = vld [vmem:[%s510] sm:$0xff]
    %v1405 = vld [vmem:[%s510 + $0x8] sm:$0xff]
    %v1406 = vpack.c.bf16 %v1402, %v1402
    %v1408 = vsel %vm185, %v1406, 0
    %1410 = vmatprep.subr.bf16.mxu0 0
    %1411 = vmatpush1.bf16.msra.mxu0 0
    %1412 = vmatprep.subr.bf16.mxu0 0
    %1413 = vmatpush1.bf16.msra.mxu0 0
    %1414 = vmatprep.subr.bf16.mxu0 0
    %1415 = vmatpush1.bf16.msra.mxu0 0
    %1416 = vmatprep.subr.bf16.mxu0 0
    %1417 = vmatpush1.bf16.msra.mxu0 0
    %1418 = vmatprep.subr.bf16.mxu0 %v1234
    %1419 = vmatpush1.bf16.msra.mxu0 %v1233
    %1420 = vmatprep.subr.bf16.mxu0 %v1232
    %1421 = vmatpush1.bf16.msra.mxu0 %v1231
    %1422 = vmatprep.subr.bf16.mxu0 %v1230
    %1423 = vmatpush1.bf16.msra.mxu0 %v1229
    %1424 = vmatprep.subr.bf16.mxu0 %v1228
    %1425 = vmatpush1.bf16.msra.mxu0 %v1227
    %1426 = vmatprep.subr.bf16.mxu0 0
    %1427 = vmatpush2.bf16.msra.mxu0 0
    %1428 = vmatprep.subr.bf16.mxu0 0
    %1429 = vmatpush2.bf16.msra.mxu0 0
    %1430 = vmatprep.subr.bf16.mxu0 0
    %1431 = vmatpush2.bf16.msra.mxu0 0
    %1432 = vmatprep.subr.bf16.mxu0 0
    %1433 = vmatpush2.bf16.msra.mxu0 0
    %1434 = vmatprep.subr.bf16.mxu0 0
    %1435 = vmatpush2.bf16.msra.mxu0 0
    %1436 = vmatprep.subr.bf16.mxu0 0
    %1437 = vmatpush2.bf16.msra.mxu0 0
    %1438 = vmatprep.subr.bf16.mxu0 0
    %1439 = vmatpush2.bf16.msra.mxu0 0
    %1440 = vmatprep.subr.bf16.mxu0 0
    %1441 = vmatpush2.bf16.msra.mxu0 0
    %1442 = vmatprep.mubr.bf16.mxu0 0
    %1443 = vmatmul.mubr.bf16.gmra.mxu0 %v1408
    %v1444 = vpop.f32.mrf.mxu0
    %v1445 = vadd.f32 0.0, %v1444
    %v1446 = vpop.f32.mrf.mxu0
    %v1447 = vadd.f32 0.0, %v1446
    %v1448 = vpop.f32.mrf.mxu0
    %v1449 = vpop.f32.mrf.mxu0
    %1450 = vdwg.mxu0
    %v1451 = vadd.f32 %v1404, %v1445
    %v1452 = vadd.f32 %v1405, %v1447
    %v1453 = vxor.u32 %v1451, 2147483648
    %v1454 = vxor.u32 %v1452, 2147483648
    %v1455 = vmul.f32 %v1453, 1.442695
    %v1456 = vpow.pop %v1455
    %v1457 = vmul.f32 %v1454, 1.442695
    %v1458 = vpow.pop %v1457
    %v1459 = vadd.f32 %v1456, 1.0
    %v1460 = vadd.f32 %v1458, 1.0
    %v1461 = vrcp.pop %v1459
    %v1462 = vmul.f32 1.0, %v1461
    %v1463 = vrcp.pop %v1460
    %v1464 = vmul.f32 1.0, %v1463
    %v1465 = vtanh.pop %v1452
    %v1466 = vmul.f32 %v1462, %v1396
    %1468 = vrot.lane.b32.xlu0 %v1465, 64
    %v1469 = vpop.permute.xlu0 %1468
    %v1471 = vmul.f32 %v1462, %v1469
    %1473 = vrot.lane.b32.xlu0 %v1471, 64
    %v1474 = vpop.permute.xlu0 %1473
    %v1476 = vadd.f32 %v1466, %v1474
    %v1477 = vtanh.pop %v1476
    %1479 = vrot.lane.b32.xlu0 %v1477, 64
    %v1480 = vpop.permute.xlu0 %1479
    %v1482 = vmul.f32 %v1464, %v1480
    %1483 = vst.msk [vmem:[%s590] sm:$0xff] %vm185, %v1482
    %v1484 = vld [vmem:[%s594] sm:$0xff]
    %v1485 = vld [vmem:[%s594 + $0x8] sm:$0xff]
    %v1486 = vpack.c.bf16 %v1482, %v1482
    %v1488 = vsel %vm185, %v1486, 0
    %1490 = vmatprep.subr.bf16.mxu0 0
    %1491 = vmatpush1.bf16.msra.mxu0 0
    %1492 = vmatprep.subr.bf16.mxu0 0
    %1493 = vmatpush1.bf16.msra.mxu0 0
    %1494 = vmatprep.subr.bf16.mxu0 0
    %1495 = vmatpush1.bf16.msra.mxu0 0
    %1496 = vmatprep.subr.bf16.mxu0 0
    %1497 = vmatpush1.bf16.msra.mxu0 0
    %1498 = vmatprep.subr.bf16.mxu0 %v1234
    %1499 = vmatpush1.bf16.msra.mxu0 %v1233
    %1500 = vmatprep.subr.bf16.mxu0 %v1232
    %1501 = vmatpush1.bf16.msra.mxu0 %v1231
    %1502 = vmatprep.subr.bf16.mxu0 %v1230
    %1503 = vmatpush1.bf16.msra.mxu0 %v1229
    %1504 = vmatprep.subr.bf16.mxu0 %v1228
    %1505 = vmatpush1.bf16.msra.mxu0 %v1227
    %1506 = vmatprep.subr.bf16.mxu0 0
    %1507 = vmatpush2.bf16.msra.mxu0 0
    %1508 = vmatprep.subr.bf16.mxu0 0
    %1509 = vmatpush2.bf16.msra.mxu0 0
    %1510 = vmatprep.subr.bf16.mxu0 0
    %1511 = vmatpush2.bf16.msra.mxu0 0
    %1512 = vmatprep.subr.bf16.mxu0 0
    %1513 = vmatpush2.bf16.msra.mxu0 0
    %1514 = vmatprep.subr.bf16.mxu0 0
    %1515 = vmatpush2.bf16.msra.mxu0 0
    %1516 = vmatprep.subr.bf16.mxu0 0
    %1517 = vmatpush2.bf16.msra.mxu0 0
    %1518 = vmatprep.subr.bf16.mxu0 0
    %1519 = vmatpush2.bf16.msra.mxu0 0
    %1520 = vmatprep.subr.bf16.mxu0 0
    %1521 = vmatpush2.bf16.msra.mxu0 0
    %1522 = vmatprep.mubr.bf16.mxu0 0
    %1523 = vmatmul.mubr.bf16.gmra.mxu0 %v1488
    %v1524 = vpop.f32.mrf.mxu0
    %v1525 = vadd.f32 0.0, %v1524
    %v1526 = vpop.f32.mrf.mxu0
    %v1527 = vadd.f32 0.0, %v1526
    %v1528 = vpop.f32.mrf.mxu0
    %v1529 = vpop.f32.mrf.mxu0
    %1530 = vdwg.mxu0
    %v1531 = vadd.f32 %v1484, %v1525
    %v1532 = vadd.f32 %v1485, %v1527
    %v1533 = vxor.u32 %v1531, 2147483648
    %v1534 = vxor.u32 %v1532, 2147483648
    %v1535 = vmul.f32 %v1533, 1.442695
    %v1536 = vpow.pop %v1535
    %v1537 = vmul.f32 %v1534, 1.442695
    %v1538 = vpow.pop %v1537
    %v1539 = vadd.f32 %v1536, 1.0
    %v1540 = vadd.f32 %v1538, 1.0
    %v1541 = vrcp.pop %v1539
    %v1542 = vmul.f32 1.0, %v1541
    %v1543 = vrcp.pop %v1540
    %v1544 = vmul.f32 1.0, %v1543
    %v1545 = vtanh.pop %v1532
    %v1546 = vmul.f32 %v1542, %v1476
    %1548 = vrot.lane.b32.xlu0 %v1545, 64
    %v1549 = vpop.permute.xlu0 %1548
    %v1551 = vmul.f32 %v1542, %v1549
    %1553 = vrot.lane.b32.xlu0 %v1551, 64
    %v1554 = vpop.permute.xlu0 %1553
    %v1556 = vadd.f32 %v1546, %v1554
    %v1557 = vtanh.pop %v1556
    %1559 = vrot.lane.b32.xlu0 %v1557, 64
    %v1560 = vpop.permute.xlu0 %1559
    %v1562 = vmul.f32 %v1544, %v1560
    %1563 = vst.msk [vmem:[%s674] sm:$0xff] %vm185, %v1562
    %v1564 = vld [vmem:[%s678] sm:$0xff]
    %v1565 = vld [vmem:[%s678 + $0x8] sm:$0xff]
    %v1566 = vpack.c.bf16 %v1562, %v1562
    %v1568 = vsel %vm185, %v1566, 0
    %1570 = vmatprep.subr.bf16.mxu0 0
    %1571 = vmatpush1.bf16.msra.mxu0 0
    %1572 = vmatprep.subr.bf16.mxu0 0
    %1573 = vmatpush1.bf16.msra.mxu0 0
    %1574 = vmatprep.subr.bf16.mxu0 0
    %1575 = vmatpush1.bf16.msra.mxu0 0
    %1576 = vmatprep.subr.bf16.mxu0 0
    %1577 = vmatpush1.bf16.msra.mxu0 0
    %1578 = vmatprep.subr.bf16.mxu0 %v1234
    %1579 = vmatpush1.bf16.msra.mxu0 %v1233
    %1580 = vmatprep.subr.bf16.mxu0 %v1232
    %1581 = vmatpush1.bf16.msra.mxu0 %v1231
    %1582 = vmatprep.subr.bf16.mxu0 %v1230
    %1583 = vmatpush1.bf16.msra.mxu0 %v1229
    %1584 = vmatprep.subr.bf16.mxu0 %v1228
    %1585 = vmatpush1.bf16.msra.mxu0 %v1227
    %1586 = vmatprep.subr.bf16.mxu0 0
    %1587 = vmatpush2.bf16.msra.mxu0 0
    %1588 = vmatprep.subr.bf16.mxu0 0
    %1589 = vmatpush2.bf16.msra.mxu0 0
    %1590 = vmatprep.subr.bf16.mxu0 0
    %1591 = vmatpush2.bf16.msra.mxu0 0
    %1592 = vmatprep.subr.bf16.mxu0 0
    %1593 = vmatpush2.bf16.msra.mxu0 0
    %1594 = vmatprep.subr.bf16.mxu0 0
    %1595 = vmatpush2.bf16.msra.mxu0 0
    %1596 = vmatprep.subr.bf16.mxu0 0
    %1597 = vmatpush2.bf16.msra.mxu0 0
    %1598 = vmatprep.subr.bf16.mxu0 0
    %1599 = vmatpush2.bf16.msra.mxu0 0
    %1600 = vmatprep.subr.bf16.mxu0 0
    %1601 = vmatpush2.bf16.msra.mxu0 0
    %1602 = vmatprep.mubr.bf16.mxu0 0
    %1603 = vmatmul.mubr.bf16.gmra.mxu0 %v1568
    %v1604 = vpop.f32.mrf.mxu0
    %v1605 = vadd.f32 0.0, %v1604
    %v1606 = vpop.f32.mrf.mxu0
    %v1607 = vadd.f32 0.0, %v1606
    %v1608 = vpop.f32.mrf.mxu0
    %v1609 = vpop.f32.mrf.mxu0
    %1610 = vdwg.mxu0
    %v1611 = vadd.f32 %v1564, %v1605
    %v1612 = vadd.f32 %v1565, %v1607
    %v1613 = vxor.u32 %v1611, 2147483648
    %v1614 = vxor.u32 %v1612, 2147483648
    %v1615 = vmul.f32 %v1613, 1.442695
    %v1616 = vpow.pop %v1615
    %v1617 = vmul.f32 %v1614, 1.442695
    %v1618 = vpow.pop %v1617
    %v1619 = vadd.f32 %v1616, 1.0
    %v1620 = vadd.f32 %v1618, 1.0
    %v1621 = vrcp.pop %v1619
    %v1622 = vmul.f32 1.0, %v1621
    %v1623 = vrcp.pop %v1620
    %v1624 = vmul.f32 1.0, %v1623
    %v1625 = vtanh.pop %v1612
    %v1626 = vmul.f32 %v1622, %v1556
    %1628 = vrot.lane.b32.xlu0 %v1625, 64
    %v1629 = vpop.permute.xlu0 %1628
    %v1631 = vmul.f32 %v1622, %v1629
    %1633 = vrot.lane.b32.xlu0 %v1631, 64
    %v1634 = vpop.permute.xlu0 %1633
    %v1636 = vadd.f32 %v1626, %v1634
    %v1637 = vtanh.pop %v1636
    %1639 = vrot.lane.b32.xlu0 %v1637, 64
    %v1640 = vpop.permute.xlu0 %1639
    %v1642 = vmul.f32 %v1624, %v1640
    %1643 = vst.msk [vmem:[%s758] sm:$0xff] %vm185, %v1642
    %v1644 = vld [vmem:[%s762] sm:$0xff]
    %v1645 = vld [vmem:[%s762 + $0x8] sm:$0xff]
    %v1646 = vpack.c.bf16 %v1642, %v1642
    %v1648 = vsel %vm185, %v1646, 0
    %1650 = vmatprep.subr.bf16.mxu0 0
    %1651 = vmatpush1.bf16.msra.mxu0 0
    %1652 = vmatprep.subr.bf16.mxu0 0
    %1653 = vmatpush1.bf16.msra.mxu0 0
    %1654 = vmatprep.subr.bf16.mxu0 0
    %1655 = vmatpush1.bf16.msra.mxu0 0
    %1656 = vmatprep.subr.bf16.mxu0 0
    %1657 = vmatpush1.bf16.msra.mxu0 0
    %1658 = vmatprep.subr.bf16.mxu0 %v1234
    %1659 = vmatpush1.bf16.msra.mxu0 %v1233
    %1660 = vmatprep.subr.bf16.mxu0 %v1232
    %1661 = vmatpush1.bf16.msra.mxu0 %v1231
    %1662 = vmatprep.subr.bf16.mxu0 %v1230
    %1663 = vmatpush1.bf16.msra.mxu0 %v1229
    %1664 = vmatprep.subr.bf16.mxu0 %v1228
    %1665 = vmatpush1.bf16.msra.mxu0 %v1227
    %1666 = vmatprep.subr.bf16.mxu0 0
    %1667 = vmatpush2.bf16.msra.mxu0 0
    %1668 = vmatprep.subr.bf16.mxu0 0
    %1669 = vmatpush2.bf16.msra.mxu0 0
    %1670 = vmatprep.subr.bf16.mxu0 0
    %1671 = vmatpush2.bf16.msra.mxu0 0
    %1672 = vmatprep.subr.bf16.mxu0 0
    %1673 = vmatpush2.bf16.msra.mxu0 0
    %1674 = vmatprep.subr.bf16.mxu0 0
    %1675 = vmatpush2.bf16.msra.mxu0 0
    %1676 = vmatprep.subr.bf16.mxu0 0
    %1677 = vmatpush2.bf16.msra.mxu0 0
    %1678 = vmatprep.subr.bf16.mxu0 0
    %1679 = vmatpush2.bf16.msra.mxu0 0
    %1680 = vmatprep.subr.bf16.mxu0 0
    %1681 = vmatpush2.bf16.msra.mxu0 0
    %1682 = vmatprep.mubr.bf16.mxu0 0
    %1683 = vmatmul.mubr.bf16.gmra.mxu0 %v1648
    %v1684 = vpop.f32.mrf.mxu0
    %v1685 = vadd.f32 0.0, %v1684
    %v1686 = vpop.f32.mrf.mxu0
    %v1687 = vadd.f32 0.0, %v1686
    %v1688 = vpop.f32.mrf.mxu0
    %v1689 = vpop.f32.mrf.mxu0
    %1690 = vdwg.mxu0
    %v1691 = vadd.f32 %v1644, %v1685
    %v1692 = vadd.f32 %v1645, %v1687
    %v1693 = vxor.u32 %v1691, 2147483648
    %v1694 = vxor.u32 %v1692, 2147483648
    %v1695 = vmul.f32 %v1693, 1.442695
    %v1696 = vpow.pop %v1695
    %v1697 = vmul.f32 %v1694, 1.442695
    %v1698 = vpow.pop %v1697
    %v1699 = vadd.f32 %v1696, 1.0
    %v1700 = vadd.f32 %v1698, 1.0
    %v1701 = vrcp.pop %v1699
    %v1702 = vmul.f32 1.0, %v1701
    %v1703 = vrcp.pop %v1700
    %v1704 = vmul.f32 1.0, %v1703
    %v1705 = vtanh.pop %v1692
    %v1706 = vmul.f32 %v1702, %v1636
    %1708 = vrot.lane.b32.xlu0 %v1705, 64
    %v1709 = vpop.permute.xlu0 %1708
    %v1711 = vmul.f32 %v1702, %v1709
    %1713 = vrot.lane.b32.xlu0 %v1711, 64
    %v1714 = vpop.permute.xlu0 %1713
    %v1716 = vadd.f32 %v1706, %v1714
    %v1717 = vtanh.pop %v1716
    %1719 = vrot.lane.b32.xlu0 %v1717, 64
    %v1720 = vpop.permute.xlu0 %1719
    %v1722 = vmul.f32 %v1704, %v1720
    %1723 = vst.msk [vmem:[%s842] sm:$0xff] %vm185, %v1722
    %v1724 = vld [vmem:[%s846] sm:$0xff]
    %v1725 = vld [vmem:[%s846 + $0x8] sm:$0xff]
    %v1726 = vpack.c.bf16 %v1722, %v1722
    %v1728 = vsel %vm185, %v1726, 0
    %1730 = vmatprep.subr.bf16.mxu0 0
    %1731 = vmatpush1.bf16.msra.mxu0 0
    %1732 = vmatprep.subr.bf16.mxu0 0
    %1733 = vmatpush1.bf16.msra.mxu0 0
    %1734 = vmatprep.subr.bf16.mxu0 0
    %1735 = vmatpush1.bf16.msra.mxu0 0
    %1736 = vmatprep.subr.bf16.mxu0 0
    %1737 = vmatpush1.bf16.msra.mxu0 0
    %1738 = vmatprep.subr.bf16.mxu0 %v1234
    %1739 = vmatpush1.bf16.msra.mxu0 %v1233
    %1740 = vmatprep.subr.bf16.mxu0 %v1232
    %1741 = vmatpush1.bf16.msra.mxu0 %v1231
    %1742 = vmatprep.subr.bf16.mxu0 %v1230
    %1743 = vmatpush1.bf16.msra.mxu0 %v1229
    %1744 = vmatprep.subr.bf16.mxu0 %v1228
    %1745 = vmatpush1.bf16.msra.mxu0 %v1227
    %1746 = vmatprep.subr.bf16.mxu0 0
    %1747 = vmatpush2.bf16.msra.mxu0 0
    %1748 = vmatprep.subr.bf16.mxu0 0
    %1749 = vmatpush2.bf16.msra.mxu0 0
    %1750 = vmatprep.subr.bf16.mxu0 0
    %1751 = vmatpush2.bf16.msra.mxu0 0
    %1752 = vmatprep.subr.bf16.mxu0 0
    %1753 = vmatpush2.bf16.msra.mxu0 0
    %1754 = vmatprep.subr.bf16.mxu0 0
    %1755 = vmatpush2.bf16.msra.mxu0 0
    %1756 = vmatprep.subr.bf16.mxu0 0
    %1757 = vmatpush2.bf16.msra.mxu0 0
    %1758 = vmatprep.subr.bf16.mxu0 0
    %1759 = vmatpush2.bf16.msra.mxu0 0
    %1760 = vmatprep.subr.bf16.mxu0 0
    %1761 = vmatpush2.bf16.msra.mxu0 0
    %1762 = vmatprep.mubr.bf16.mxu0 0
    %1763 = vmatmul.mubr.bf16.gmra.mxu0 %v1728
    %v1764 = vpop.f32.mrf.mxu0
    %v1765 = vadd.f32 0.0, %v1764
    %v1766 = vpop.f32.mrf.mxu0
    %v1767 = vadd.f32 0.0, %v1766
    %v1768 = vpop.f32.mrf.mxu0
    %v1769 = vpop.f32.mrf.mxu0
    %1770 = vdwg.mxu0
    %v1771 = vadd.f32 %v1724, %v1765
    %v1772 = vadd.f32 %v1725, %v1767
    %v1773 = vxor.u32 %v1771, 2147483648
    %v1774 = vxor.u32 %v1772, 2147483648
    %v1775 = vmul.f32 %v1773, 1.442695
    %v1776 = vpow.pop %v1775
    %v1777 = vmul.f32 %v1774, 1.442695
    %v1778 = vpow.pop %v1777
    %v1779 = vadd.f32 %v1776, 1.0
    %v1780 = vadd.f32 %v1778, 1.0
    %v1781 = vrcp.pop %v1779
    %v1782 = vmul.f32 1.0, %v1781
    %v1783 = vrcp.pop %v1780
    %v1784 = vmul.f32 1.0, %v1783
    %v1785 = vtanh.pop %v1772
    %v1786 = vmul.f32 %v1782, %v1716
    %1788 = vrot.lane.b32.xlu0 %v1785, 64
    %v1789 = vpop.permute.xlu0 %1788
    %v1791 = vmul.f32 %v1782, %v1789
    %1793 = vrot.lane.b32.xlu0 %v1791, 64
    %v1794 = vpop.permute.xlu0 %1793
    %v1796 = vadd.f32 %v1786, %v1794
    %v1797 = vtanh.pop %v1796
    %1799 = vrot.lane.b32.xlu0 %v1797, 64
    %v1800 = vpop.permute.xlu0 %1799
    %v1802 = vmul.f32 %v1784, %v1800
    %1803 = vst.msk [vmem:[%s926] sm:$0xff] %vm185, %v1802
    %v1804 = vld [vmem:[%s930] sm:$0xff]
    %v1805 = vld [vmem:[%s930 + $0x8] sm:$0xff]
    %v1806 = vpack.c.bf16 %v1802, %v1802
    %v1808 = vsel %vm185, %v1806, 0
    %1810 = vmatprep.subr.bf16.mxu0 0
    %1811 = vmatpush1.bf16.msra.mxu0 0
    %1812 = vmatprep.subr.bf16.mxu0 0
    %1813 = vmatpush1.bf16.msra.mxu0 0
    %1814 = vmatprep.subr.bf16.mxu0 0
    %1815 = vmatpush1.bf16.msra.mxu0 0
    %1816 = vmatprep.subr.bf16.mxu0 0
    %1817 = vmatpush1.bf16.msra.mxu0 0
    %1818 = vmatprep.subr.bf16.mxu0 %v1234
    %1819 = vmatpush1.bf16.msra.mxu0 %v1233
    %1820 = vmatprep.subr.bf16.mxu0 %v1232
    %1821 = vmatpush1.bf16.msra.mxu0 %v1231
    %1822 = vmatprep.subr.bf16.mxu0 %v1230
    %1823 = vmatpush1.bf16.msra.mxu0 %v1229
    %1824 = vmatprep.subr.bf16.mxu0 %v1228
    %1825 = vmatpush1.bf16.msra.mxu0 %v1227
    %1826 = vmatprep.subr.bf16.mxu0 0
    %1827 = vmatpush2.bf16.msra.mxu0 0
    %1828 = vmatprep.subr.bf16.mxu0 0
    %1829 = vmatpush2.bf16.msra.mxu0 0
    %1830 = vmatprep.subr.bf16.mxu0 0
    %1831 = vmatpush2.bf16.msra.mxu0 0
    %1832 = vmatprep.subr.bf16.mxu0 0
    %1833 = vmatpush2.bf16.msra.mxu0 0
    %1834 = vmatprep.subr.bf16.mxu0 0
    %1835 = vmatpush2.bf16.msra.mxu0 0
    %1836 = vmatprep.subr.bf16.mxu0 0
    %1837 = vmatpush2.bf16.msra.mxu0 0
    %1838 = vmatprep.subr.bf16.mxu0 0
    %1839 = vmatpush2.bf16.msra.mxu0 0
    %1840 = vmatprep.subr.bf16.mxu0 0
    %1841 = vmatpush2.bf16.msra.mxu0 0
    %1842 = vmatprep.mubr.bf16.mxu0 0
    %1843 = vmatmul.mubr.bf16.gmra.mxu0 %v1808
    %v1844 = vpop.f32.mrf.mxu0
    %v1845 = vadd.f32 0.0, %v1844
    %v1846 = vpop.f32.mrf.mxu0
    %v1847 = vadd.f32 0.0, %v1846
    %v1848 = vpop.f32.mrf.mxu0
    %v1849 = vpop.f32.mrf.mxu0
    %1850 = vdwg.mxu0
    %v1851 = vadd.f32 %v1804, %v1845
    %v1852 = vadd.f32 %v1805, %v1847
    %v1853 = vxor.u32 %v1851, 2147483648
    %v1854 = vxor.u32 %v1852, 2147483648
    %v1855 = vmul.f32 %v1853, 1.442695
    %v1856 = vpow.pop %v1855
    %v1857 = vmul.f32 %v1854, 1.442695
    %v1858 = vpow.pop %v1857
    %v1859 = vadd.f32 %v1856, 1.0
    %v1860 = vadd.f32 %v1858, 1.0
    %v1861 = vrcp.pop %v1859
    %v1862 = vmul.f32 1.0, %v1861
    %v1863 = vrcp.pop %v1860
    %v1864 = vmul.f32 1.0, %v1863
    %v1865 = vtanh.pop %v1852
    %v1866 = vmul.f32 %v1862, %v1796
    %1868 = vrot.lane.b32.xlu0 %v1865, 64
    %v1869 = vpop.permute.xlu0 %1868
    %v1871 = vmul.f32 %v1862, %v1869
    %1873 = vrot.lane.b32.xlu0 %v1871, 64
    %v1874 = vpop.permute.xlu0 %1873
    %v1876 = vadd.f32 %v1866, %v1874
    %v1877 = vtanh.pop %v1876
    %1879 = vrot.lane.b32.xlu0 %v1877, 64
    %v1880 = vpop.permute.xlu0 %1879
    %v1882 = vmul.f32 %v1864, %v1880
    %1883 = vst.msk [vmem:[%s1010] sm:$0xff] %vm185, %v1882
    %v1884 = vld [vmem:[#allocation3] sm:$0xff]
    %v1885 = vld [vmem:[#allocation3 + $0x8] sm:$0xff]
    %v1886 = vld [vmem:[#allocation3 + $0x10] sm:$0xff]
    %v1887 = vld [vmem:[#allocation3 + $0x18] sm:$0xff]
    %v1888 = vld [vmem:[#allocation3 + $0x20] sm:$0xff]
    %v1889 = vld [vmem:[#allocation3 + $0x28] sm:$0xff]
    %v1890 = vld [vmem:[#allocation3 + $0x30] sm:$0xff]
    %v1891 = vld [vmem:[#allocation3 + $0x38] sm:$0xff]
    %v1892 = vpack.c.bf16 %v1885, %v1884
    %v1893 = vpack.c.bf16 %v1887, %v1886
    %v1894 = vpack.c.bf16 %v1889, %v1888
    %v1895 = vpack.c.bf16 %v1891, %v1890
    %v1896 = vld [vmem:[#allocation13] sm:$0xf]
    %v1897 = vld [vmem:[#allocation13 + $0x4] sm:$0xf]
    %v1898 = vld [vmem:[#allocation13 + $0x8] sm:$0xf]
    %v1899 = vld [vmem:[#allocation13 + $0xc] sm:$0xf]
    %v1900 = vld [vmem:[#allocation13 + $0x10] sm:$0xf]
    %v1901 = vld [vmem:[#allocation13 + $0x14] sm:$0xf]
    %v1902 = vld [vmem:[#allocation13 + $0x18] sm:$0xf]
    %v1903 = vld [vmem:[#allocation13 + $0x1c] sm:$0xf]
    %v1904 = vld [vmem:[%s7] sm:$0x1]
    %v1906 = vlaneseq
    %v1907 = vshrl.u32 %v1906, 7
    %v1908 = vsub.s32 0, %v1907
    %v1909 = vrot.slane %v1904, %v1908
    %v1919 = vunpack.c.l.b16 %v1896
    %v1920 = vunpack.c.l.b16 %v1897
    %v1921 = vunpack.c.l.b16 %v1898
    %v1922 = vunpack.c.l.b16 %v1899
    %v1923 = vunpack.c.l.b16 %v1900
    %v1924 = vunpack.c.l.b16 %v1901
    %v1925 = vunpack.c.l.b16 %v1902
    %v1926 = vunpack.c.l.b16 %v1903
    %v1927 = vpack.c.b16 %v1920, %v1919
    %v1928 = vpack.c.b16 %v1922, %v1921
    %v1929 = vpack.c.b16 %v1924, %v1923
    %v1930 = vpack.c.b16 %v1926, %v1925
    %v1936 = vsel %vm185, %v1892, 0
    %v1939 = vsel %vm185, %v1893, 0
    %v1942 = vsel %vm185, %v1894, 0
    %v1945 = vsel %vm185, %v1895, 0
    %1947 = vmatprep.subr.bf16.mxu0 0
    %1948 = vmatpush1.bf16.msra.mxu0 0
    %1949 = vmatprep.subr.bf16.mxu0 0
    %1950 = vmatpush1.bf16.msra.mxu0 0
    %1951 = vmatprep.subr.bf16.mxu0 0
    %1952 = vmatpush1.bf16.msra.mxu0 0
    %1953 = vmatprep.subr.bf16.mxu0 0
    %1954 = vmatpush1.bf16.msra.mxu0 0
    %1955 = vmatprep.subr.bf16.mxu0 0
    %1956 = vmatpush1.bf16.msra.mxu0 %v1930
    %1957 = vmatprep.subr.bf16.mxu0 0
    %1958 = vmatpush1.bf16.msra.mxu0 %v1929
    %1959 = vmatprep.subr.bf16.mxu0 0
    %1960 = vmatpush1.bf16.msra.mxu0 %v1928
    %1961 = vmatprep.subr.bf16.mxu0 0
    %1962 = vmatpush1.bf16.msra.mxu0 %v1927
    %1963 = vmatprep.subr.bf16.mxu0 0
    %1964 = vmatpush2.bf16.msra.mxu0 0
    %1965 = vmatprep.subr.bf16.mxu0 0
    %1966 = vmatpush2.bf16.msra.mxu0 0
    %1967 = vmatprep.subr.bf16.mxu0 0
    %1968 = vmatpush2.bf16.msra.mxu0 0
    %1969 = vmatprep.subr.bf16.mxu0 0
    %1970 = vmatpush2.bf16.msra.mxu0 0
    %1971 = vmatprep.subr.bf16.mxu0 0
    %1972 = vmatpush2.bf16.msra.mxu0 0
    %1973 = vmatprep.subr.bf16.mxu0 0
    %1974 = vmatpush2.bf16.msra.mxu0 0
    %1975 = vmatprep.subr.bf16.mxu0 0
    %1976 = vmatpush2.bf16.msra.mxu0 0
    %1977 = vmatprep.subr.bf16.mxu0 0
    %1978 = vmatpush2.bf16.msra.mxu0 0
    %1979 = vmatprep.mubr.bf16.mxu0 0
    %1980 = vmatmul.mubr.bf16.gmra.mxu0 %v1936
    %v1981 = vpop.f32.mrf.mxu0
    %v1982 = vadd.f32 %v1909, %v1981
    %v1983 = vpop.f32.mrf.mxu0
    %v1984 = vpop.f32.mrf.mxu0
    %v1985 = vadd.f32 %v1909, %v1984
    %v1986 = vpop.f32.mrf.mxu0
    %1987 = vmatprep.mubr.bf16.mxu0 0
    %1988 = vmatmul.mubr.bf16.gmra.mxu0 %v1939
    %v1989 = vpop.f32.mrf.mxu0
    %v1990 = vadd.f32 %v1909, %v1989
    %v1991 = vpop.f32.mrf.mxu0
    %v1992 = vpop.f32.mrf.mxu0
    %v1993 = vadd.f32 %v1909, %v1992
    %v1994 = vpop.f32.mrf.mxu0
    %1995 = vmatprep.mubr.bf16.mxu0 0
    %1996 = vmatmul.mubr.bf16.gmra.mxu0 %v1942
    %v1997 = vpop.f32.mrf.mxu0
    %v1998 = vadd.f32 %v1909, %v1997
    %v1999 = vpop.f32.mrf.mxu0
    %v2000 = vpop.f32.mrf.mxu0
    %v2001 = vadd.f32 %v1909, %v2000
    %v2002 = vpop.f32.mrf.mxu0
    %2003 = vmatprep.mubr.bf16.mxu0 0
    %2004 = vmatmul.mubr.bf16.gmra.mxu0 %v1945
    %v2005 = vpop.f32.mrf.mxu0
    %v2006 = vadd.f32 %v1909, %v2005
    %v2007 = vpop.f32.mrf.mxu0
    %v2008 = vpop.f32.mrf.mxu0
    %v2009 = vadd.f32 %v1909, %v2008
    %v2010 = vpop.f32.mrf.mxu0
    %2011 = vdwg.mxu0
    %2012 = vst [vmem:[#allocation15] sm:$0xff] %v1982
    %2013 = vst [vmem:[#allocation15 + $0x8] sm:$0xff] %v1985
    %2014 = vst [vmem:[#allocation15 + $0x10] sm:$0xff] %v1990
    %2015 = vst [vmem:[#allocation15 + $0x18] sm:$0xff] %v1993
    %2016 = vst [vmem:[#allocation15 + $0x20] sm:$0xff] %v1998
    %2017 = vst [vmem:[#allocation15 + $0x28] sm:$0xff] %v2001
    %2018 = vst [vmem:[#allocation15 + $0x30] sm:$0xff] %v2006
    %2019 = vst [vmem:[#allocation15 + $0x38] sm:$0xff] %v2009
    // Predicated region
    $region58: #{tpu_custom_call.1} parent=1 // pred_check
      _
    $region59: #{tpu_custom_call.1} parent=1 // pred_check_branch
      %2021 = sbr.rel (0) target = $region61
    $region60: #{tpu_custom_call.1} parent=1 // pred_region
      %s2023 = ssub.s32 1024, 1024
      %2024 = vsyncadd [#allocation6], %s2023
      %s2025 = sshll.u32 [#allocation15], 4
      %s2026 = int_to_ptr.vmem [resolvable:$true] %s2025
      %2031 = dma.vmem_to_hbm [thread:$0]  %s2026, 1024, %s8, [#allocation6], 128, 128, 8
    $region61: #{tpu_custom_call.1} parent=1 // pred_fallthru
      _
    // Predicated region
    $region62: #{tpu_custom_call.1} parent=1 // pred_check
      _
    $region63: #{tpu_custom_call.1} parent=1 // pred_check_branch
      %2033 = sbr.rel (0) target = $region65
    $region64: #{tpu_custom_call.1} parent=1 // pred_region
      %2034 = dma.done [#allocation6], 1024
    $region65: #{tpu_custom_call.1} parent=1 // pred_fallthru
      _
    %2035 = vsyncpa [#allocation5], 1
    %2036 = vsyncpa [#allocation8], 1
    %2037 = vsyncpa [#allocation11], 1
    %2038 = vsyncpa [#allocation14], 1
    %2039 = vsyncpa [#allocation6], 1

</llo_original>
